<compile_context>
chip_gen: v7x
topology: tpu7x:2x2x1
jax: 0.10.0
libtpu: 0.0.40
codegen_flags: <defaults>
</compile_context>

<pallas_src>
import functools

import jax
import jax.numpy as jnp
from jax.experimental import pallas as pl
from jax.experimental.pallas import tpu as pltpu

_LANE = 128
_MAX_TILE = 512
_VMEM_LIMIT = 64 * 1024 * 1024  # <= physical VMEM on v5e/v6e (128 MiB) and v7x (64 MiB)


def _round_up(x, m):
    return (x + m - 1) // m * m


# ---------------------------------------------------------------------------
# Kernels
# ---------------------------------------------------------------------------
def _rgcn_msg_kernel_a_first(cnt_ref, a_ref, xsrc_ref, xdst_ref, w_ref,
                             wroot_ref, b_ref, o_ref, ax_ref, acc_ref,
                             *, apply_relu):
    """Message passing, order (A_r @ X) @ W_r.  Grid = (dst_tile, rel, src_tile)."""
    i = pl.program_id(0)
    r = pl.program_id(1)
    k = pl.program_id(2)
    ni = pl.num_programs(0)
    nr = pl.num_programs(1)
    nk = pl.num_programs(2)

    @pl.when(jnp.logical_and(r == 0, k == 0))
    def _():  # self-loop (root) term + bias, f32 accumulator
        acc_ref[...] = (
            jnp.dot(xdst_ref[...], wroot_ref[...],
                    preferred_element_type=jnp.float32)
            + b_ref[...]
        )

    @pl.when(k == 0)
    def _():
        ax_ref[...] = jnp.zeros_like(ax_ref)

    # skip MXU work on adjacency tiles with no edges (scalar-prefetched flag)
    idx = (r * ni + i) * nk + k

    @pl.when(cnt_ref[idx] > 0)
    def _():
        ax_ref[...] += jnp.dot(a_ref[...], xsrc_ref[...],
                               preferred_element_type=jnp.float32)

    @pl.when(k == nk - 1)
    def _():
        acc_ref[...] += jnp.dot(ax_ref[...].astype(jnp.bfloat16), w_ref[...],
                                preferred_element_type=jnp.float32)

    @pl.when(jnp.logical_and(r == nr - 1, k == nk - 1))
    def _():
        res = acc_ref[...]
        if apply_relu:
            res = jnp.maximum(res, 0.0)
        o_ref[...] = res.astype(o_ref.dtype)


def _rgcn_msg_kernel_w_first(cnt_ref, a_ref, xw_ref, xdst_ref, wroot_ref,
                             b_ref, o_ref, acc_ref, *, apply_relu):
    """Message passing, order A_r @ (X @ W_r); X @ W_r precomputed per relation."""
    i = pl.program_id(0)
    r = pl.program_id(1)
    k = pl.program_id(2)
    ni = pl.num_programs(0)
    nr = pl.num_programs(1)
    nk = pl.num_programs(2)

    @pl.when(jnp.logical_and(r == 0, k == 0))
    def _():
        acc_ref[...] = (
            jnp.dot(xdst_ref[...], wroot_ref[...],
                    preferred_element_type=jnp.float32)
            + b_ref[...]
        )

    idx = (r * ni + i) * nk + k

    @pl.when(cnt_ref[idx] > 0)
    def _():
        acc_ref[...] += jnp.dot(a_ref[...], xw_ref[...],
                                preferred_element_type=jnp.float32)

    @pl.when(jnp.logical_and(r == nr - 1, k == nk - 1))
    def _():
        res = acc_ref[...]
        if apply_relu:
            res = jnp.maximum(res, 0.0)
        o_ref[...] = res.astype(o_ref.dtype)


def _rel_xform_kernel(x_ref, w_ref, o_ref):
    """Per-relation feature transform xw[r] = x @ W_r (small matmul)."""
    o_ref[...] = jnp.dot(x_ref[...], w_ref[...],
                         preferred_element_type=jnp.float32).astype(o_ref.dtype)


# ---------------------------------------------------------------------------
# Layer wrapper
# ---------------------------------------------------------------------------
def rgcn_layer(adj, counts, x, weight, root, bias, *, apply_relu,
               f_in_orig, f_out_orig, tile_m, tile_k, out_dtype):
    """adj: (R, N_p, N_p) bf16, counts: (R*I*K,) int32, x: (N_p, F_in_p),
    weight: (R, F_in_p, F_out_p), root: (F_in_p, F_out_p), bias: (F_out_p,)."""
    R, n_p, _ = adj.shape
    f_in_p, f_out_p = root.shape
    n_i = n_p // tile_m
    n_k = n_p // tile_k

    bias2d = bias.reshape(1, f_out_p).astype(jnp.float32)
    x_bf = x.astype(jnp.bfloat16)
    w_bf = weight.astype(jnp.bfloat16)
    root_bf = root.astype(jnp.bfloat16)

    params = pltpu.CompilerParams(
        dimension_semantics=("parallel", "arbitrary", "arbitrary"),
        vmem_limit_bytes=_VMEM_LIMIT)

    use_w_first = f_out_orig < f_in_orig

    if use_w_first:
        # Pre-transform features per relation so the O(N^2) contraction runs
        # through the narrower F_out dimension.
        xw = pl.pallas_call(
            _rel_xform_kernel,
            out_shape=jax.ShapeDtypeStruct((R, n_p, f_out_p), jnp.bfloat16),
            grid_spec=pltpu.PrefetchScalarGridSpec(
                num_scalar_prefetch=0,
                grid=(R, n_k),
                in_specs=[
                    pl.BlockSpec((tile_k, f_in_p), lambda r, k: (k, 0)),
                    pl.BlockSpec((None, f_in_p, f_out_p),
                                 lambda r, k: (r, 0, 0)),
                ],
                out_specs=pl.BlockSpec((None, tile_k, f_out_p),
                                       lambda r, k: (r, k, 0)),
            ),
            compiler_params=pltpu.CompilerParams(
                dimension_semantics=("parallel", "parallel"),
                vmem_limit_bytes=_VMEM_LIMIT),
        )(x_bf, w_bf)

        kernel = functools.partial(_rgcn_msg_kernel_w_first,
                                   apply_relu=apply_relu)
        return pl.pallas_call(
            kernel,
            out_shape=jax.ShapeDtypeStruct((n_p, f_out_p), out_dtype),
            grid_spec=pltpu.PrefetchScalarGridSpec(
                num_scalar_prefetch=1,
                grid=(n_i, R, n_k),
                in_specs=[
                    pl.BlockSpec((None, tile_m, tile_k),
                                 lambda i, r, k, cnt: (r, i, k)),       # A tile
                    pl.BlockSpec((None, tile_k, f_out_p),
                                 lambda i, r, k, cnt: (r, k, 0)),       # xw tile
                    pl.BlockSpec((tile_m, f_in_p),
                                 lambda i, r, k, cnt: (i, 0)),          # x (dst, root)
                    pl.BlockSpec((f_in_p, f_out_p),
                                 lambda i, r, k, cnt: (0, 0)),          # W_root
                    pl.BlockSpec((1, f_out_p),
                                 lambda i, r, k, cnt: (0, 0)),          # bias
                ],
                out_specs=pl.BlockSpec((tile_m, f_out_p),
                                       lambda i, r, k, cnt: (i, 0)),
                scratch_shapes=[pltpu.VMEM((tile_m, f_out_p), jnp.float32)],
            ),
            compiler_params=params,
        )(counts, adj, xw, x_bf, root_bf, bias2d)

    kernel = functools.partial(_rgcn_msg_kernel_a_first, apply_relu=apply_relu)
    return pl.pallas_call(
        kernel,
        out_shape=jax.ShapeDtypeStruct((n_p, f_out_p), out_dtype),
        grid_spec=pltpu.PrefetchScalarGridSpec(
            num_scalar_prefetch=1,
            grid=(n_i, R, n_k),
            in_specs=[
                pl.BlockSpec((None, tile_m, tile_k),
                             lambda i, r, k, cnt: (r, i, k)),           # A tile
                pl.BlockSpec((tile_k, f_in_p),
                             lambda i, r, k, cnt: (k, 0)),              # x (src)
                pl.BlockSpec((tile_m, f_in_p),
                             lambda i, r, k, cnt: (i, 0)),              # x (dst, root)
                pl.BlockSpec((None, f_in_p, f_out_p),
                             lambda i, r, k, cnt: (r, 0, 0)),           # W_r
                pl.BlockSpec((f_in_p, f_out_p),
                             lambda i, r, k, cnt: (0, 0)),              # W_root
                pl.BlockSpec((1, f_out_p),
                             lambda i, r, k, cnt: (0, 0)),              # bias
            ],
            out_specs=pl.BlockSpec((tile_m, f_out_p),
                                   lambda i, r, k, cnt: (i, 0)),
            scratch_shapes=[pltpu.VMEM((tile_m, f_in_p), jnp.float32),
                            pltpu.VMEM((tile_m, f_out_p), jnp.float32)],
        ),
        compiler_params=params,
    )(counts, adj, x_bf, x_bf, w_bf, root_bf, bias2d)


# ---------------------------------------------------------------------------
# Graph glue (plain JAX)
# ---------------------------------------------------------------------------
# TODO(synk): edge-list -> dense normalized adjacency stays in plain JAX glue;
# a CSR / segment-sum gather Pallas kernel would avoid the O(R*N^2) dense form.
def build_normalized_adjacency(edge_index, edge_type, num_relations,
                               padded_nodes, tile_m, tile_k):
    """A[r, i, j] = 1/deg_r(i) per edge j->i of relation r (PyG aggr='mean').

    Returns (A in bf16, per-tile occupancy flags int32 flattened (R, I, K))."""
    src = edge_index[0]
    dst = edge_index[1]
    a = jnp.zeros((num_relations, padded_nodes, padded_nodes), dtype=jnp.float32)
    a = a.at[edge_type, dst, src].add(1.0)
    deg = a.sum(axis=2, keepdims=True)
    a = a / jnp.where(deg > 0.0, deg, 1.0)

    n_i = padded_nodes // tile_m
    n_k = padded_nodes // tile_k
    blocks = a.reshape(num_relations, n_i, tile_m, n_k, tile_k)
    counts = (blocks.sum(axis=(2, 4)) > 0.0).astype(jnp.int32).reshape(-1)
    return a.astype(jnp.bfloat16), counts


class RGCNPallas:
    """Two-layer RGCN: relu(conv1(x)) -> conv2."""

    def __init__(self, in_channels, hidden_channels, out_channels,
                 num_relations, key):
        k = jax.random.split(key, 4)

        def glorot(key, shape):
            fan_in, fan_out = shape[-2], shape[-1]
            limit = (6.0 / (fan_in + fan_out)) ** 0.5
            return jax.random.uniform(key, shape, jnp.float32, -limit, limit)

        def pad2(a, rows, cols):
            return jnp.zeros((rows, cols), a.dtype).at[:a.shape[0], :a.shape[1]].set(a)

        def pad3(a, rows, cols):
            return jnp.zeros((a.shape[0], rows, cols), a.dtype).at[
                :, :a.shape[1], :a.shape[2]].set(a)

        self.in_channels = in_channels
        self.hidden_channels = hidden_channels
        self.out_channels = out_channels
        self.num_relations = num_relations

        # lane-dense (128-padded) feature dims
        self.f_in_p = _round_up(in_channels, _LANE)
        self.f_hid_p = _round_up(hidden_channels, _LANE)
        self.f_out_p = _round_up(out_channels, _LANE)

        # conv1 params (zero-padded; padding rows/cols never contaminate real ones)
        self.w1 = pad3(glorot(k[0], (num_relations, in_channels, hidden_channels)),
                       self.f_in_p, self.f_hid_p)
        self.root1 = pad2(glorot(k[1], (in_channels, hidden_channels)),
                          self.f_in_p, self.f_hid_p)
        self.b1 = jnp.zeros((self.f_hid_p,), jnp.float32)
        # conv2 params
        self.w2 = pad3(glorot(k[2], (num_relations, hidden_channels, out_channels)),
                       self.f_hid_p, self.f_out_p)
        self.root2 = pad2(glorot(k[3], (hidden_channels, out_channels)),
                          self.f_hid_p, self.f_out_p)
        self.b2 = jnp.zeros((self.f_out_p,), jnp.float32)

    def __call__(self, x, edge_index, edge_type):
        num_nodes, f_in = x.shape
        tile = min(_MAX_TILE, _round_up(num_nodes, _LANE))
        n_p = _round_up(num_nodes, tile)

        adj, counts = build_normalized_adjacency(
            edge_index, edge_type, self.num_relations, n_p, tile, tile)

        x_p = jnp.zeros((n_p, self.f_in_p), jnp.float32).at[
            :num_nodes, :f_in].set(x)

        h = rgcn_layer(adj, counts, x_p, self.w1, self.root1, self.b1,
                       apply_relu=True,
                       f_in_orig=self.in_channels,
                       f_out_orig=self.hidden_channels,
                       tile_m=tile, tile_k=tile, out_dtype=jnp.bfloat16)
        out = rgcn_layer(adj, counts, h, self.w2, self.root2, self.b2,
                         apply_relu=False,
                         f_in_orig=self.hidden_channels,
                         f_out_orig=self.out_channels,
                         tile_m=tile, tile_k=tile, out_dtype=jnp.float32)
        return out[:num_nodes, :self.out_channels]


if __name__ == "__main__":
    key = jax.random.PRNGKey(0)
    k_x, k_src, k_dst, k_rel, k_params = jax.random.split(key, 5)

    num_nodes = 16
    in_channels = 8
    hidden_channels = 32
    out_channels = 8
    num_relations = 4
    num_edges = 40

    x = jax.random.normal(k_x, (num_nodes, in_channels), dtype=jnp.float32)
    edge_index = jnp.stack([
        jax.random.randint(k_src, (num_edges,), 0, num_nodes),
        jax.random.randint(k_dst, (num_edges,), 0, num_nodes),
    ])
    edge_type = jax.random.randint(k_rel, (num_edges,), 0, num_relations)

    model = RGCNPallas(in_channels, hidden_channels, out_channels,
                       num_relations, k_params)

    out = model(x, edge_index, edge_type)
    jax.block_until_ready(out)
    assert out.shape == (num_nodes, out_channels)
    print("KERNEL_OK")
</pallas_src>

<mosaic_0001>
module attributes {stable_mosaic.version = 11 : i64} {
  func.func @_rgcn_msg_kernel_a_first(%arg0: i32, %arg1: i32, %arg2: i32, %arg3: memref<4xi32, #tpu.memory_space<smem>>, %arg4: memref<1x128x128xbf16, #tpu.memory_space<vmem>>, %arg5: memref<128x128xbf16, #tpu.memory_space<vmem>>, %arg6: memref<128x128xbf16, #tpu.memory_space<vmem>>, %arg7: memref<1x128x128xbf16, #tpu.memory_space<vmem>>, %arg8: memref<128x128xbf16, #tpu.memory_space<vmem>>, %arg9: memref<1x128xf32, #tpu.memory_space<vmem>>, %arg10: memref<128x128xbf16, #tpu.memory_space<vmem>>, %arg11: memref<128x128xf32, #tpu.memory_space<vmem>>, %arg12: memref<128x128xf32, #tpu.memory_space<vmem>>) attributes {dimension_semantics = [#tpu.dimension_semantics<parallel>, #tpu.dimension_semantics<arbitrary>, #tpu.dimension_semantics<arbitrary>], iteration_bounds = array<i64: 1, 4, 1>, scalar_prefetch = 1 : i64, scratch_operands = 2 : i64, tpu.core_type = #tpu.core_type<tc>, window_params = [{transform_indices = @transform_0, window_bounds = array<i64: 1, 128, 128>}, {transform_indices = @transform_1, window_bounds = array<i64: 128, 128>}, {transform_indices = @transform_2, window_bounds = array<i64: 128, 128>}, {transform_indices = @transform_3, window_bounds = array<i64: 1, 128, 128>}, {pipeline_mode = #tpu.pipeline_mode<synchronous>, transform_indices = @transform_4, window_bounds = array<i64: 128, 128>}, {pipeline_mode = #tpu.pipeline_mode<synchronous>, transform_indices = @transform_5, window_bounds = array<i64: 1, 128>}, {transform_indices = @transform_6, window_bounds = array<i64: 128, 128>}]} {
    %c0_i32 = arith.constant 0 : i32
    %0 = arith.cmpi eq, %arg1, %c0_i32 : i32
    %c0_i32_0 = arith.constant 0 : i32
    %1 = arith.cmpi eq, %arg2, %c0_i32_0 : i32
    %2 = arith.andi %0, %1 : i1
    %3 = arith.extui %2 : i1 to i32
    %c0_i32_1 = arith.constant 0 : i32
    %4 = arith.cmpi ne, %3, %c0_i32_1 : i32
    scf.if %4 {
      %c0 = arith.constant 0 : index
      %c0_11 = arith.constant 0 : index
      %25 = vector.load %arg6[%c0, %c0_11] : memref<128x128xbf16, #tpu.memory_space<vmem>>, vector<128x128xbf16>
      %c0_12 = arith.constant 0 : index
      %c0_13 = arith.constant 0 : index
      %26 = vector.load %arg8[%c0_12, %c0_13] : memref<128x128xbf16, #tpu.memory_space<vmem>>, vector<128x128xbf16>
      %cst = arith.constant dense<0.000000e+00> : vector<128x128xf32>
      %27 = tpu.matmul %25, %26, %cst {dimension_numbers = #tpu.dot_dimension_numbers<[1], [0], [0], [1], [0, 0, 1, 1], [], []>} : vector<128x128xbf16>, vector<128x128xbf16>, vector<128x128xf32> -> vector<128x128xf32>
      %c0_14 = arith.constant 0 : index
      %c0_15 = arith.constant 0 : index
      %28 = vector.load %arg9[%c0_14, %c0_15] : memref<1x128xf32, #tpu.memory_space<vmem>>, vector<1x128xf32>
      %29 = vector.broadcast %28 : vector<1x128xf32> to vector<128x128xf32>
      %30 = arith.addf %27, %29 : vector<128x128xf32>
      %c0_16 = arith.constant 0 : index
      %c0_17 = arith.constant 0 : index
      %31 = vector.load %arg12[%c0_16, %c0_17] : memref<128x128xf32, #tpu.memory_space<vmem>>, vector<128x128xf32>
      tpu.vector_store %arg12[%c0_16, %c0_17], %30 {strides = array<i32>} : memref<128x128xf32, #tpu.memory_space<vmem>>, vector<128x128xf32>,
    } else {
    }
    %c0_i32_2 = arith.constant 0 : i32
    %5 = arith.cmpi eq, %arg2, %c0_i32_2 : i32
    %6 = arith.extui %5 : i1 to i32
    %c0_i32_3 = arith.constant 0 : i32
    %7 = arith.cmpi ne, %6, %c0_i32_3 : i32
    scf.if %7 {
      %cst = arith.constant 0.000000e+00 : f32
      %25 = vector.broadcast %cst : f32 to vector<128x128xf32>
      %c0 = arith.constant 0 : index
      %c0_11 = arith.constant 0 : index
      %26 = vector.load %arg11[%c0, %c0_11] : memref<128x128xf32, #tpu.memory_space<vmem>>, vector<128x128xf32>
      tpu.vector_store %arg11[%c0, %c0_11], %25 {strides = array<i32>} : memref<128x128xf32, #tpu.memory_space<vmem>>, vector<128x128xf32>,
    } else {
    }
    %c1_i32 = arith.constant 1 : i32
    %8 = arith.muli %arg1, %c1_i32 : i32
    %9 = arith.addi %8, %arg0 : i32
    %c1_i32_4 = arith.constant 1 : i32
    %10 = arith.muli %9, %c1_i32_4 : i32
    %11 = arith.addi %10, %arg2 : i32
    %12 = arith.index_cast %11 : i32 to index
    %13 = memref.load %arg3[%12] : memref<4xi32, #tpu.memory_space<smem>>
    %c0_i32_5 = arith.constant 0 : i32
    %14 = arith.cmpi sgt, %13, %c0_i32_5 : i32
    %15 = arith.extui %14 : i1 to i32
    %c0_i32_6 = arith.constant 0 : i32
    %16 = arith.cmpi ne, %15, %c0_i32_6 : i32
    scf.if %16 {
      %c0 = arith.constant 0 : index
      %c0_11 = arith.constant 0 : index
      %25 = vector.load %arg11[%c0, %c0_11] : memref<128x128xf32, #tpu.memory_space<vmem>>, vector<128x128xf32>
      %c0_12 = arith.constant 0 : index
      %c0_13 = arith.constant 0 : index
      %c0_14 = arith.constant 0 : index
      %26 = vector.load %arg4[%c0_12, %c0_13, %c0_14] : memref<1x128x128xbf16, #tpu.memory_space<vmem>>, vector<1x128x128xbf16>
      %27 = vector.shape_cast %26 : vector<1x128x128xbf16> to vector<128x128xbf16>
      %c0_15 = arith.constant 0 : index
      %c0_16 = arith.constant 0 : index
      %28 = vector.load %arg5[%c0_15, %c0_16] : memref<128x128xbf16, #tpu.memory_space<vmem>>, vector<128x128xbf16>
      %cst = arith.constant dense<0.000000e+00> : vector<128x128xf32>
      %29 = tpu.matmul %27, %28, %cst {dimension_numbers = #tpu.dot_dimension_numbers<[1], [0], [0], [1], [0, 0, 1, 1], [], []>} : vector<128x128xbf16>, vector<128x128xbf16>, vector<128x128xf32> -> vector<128x128xf32>
      %30 = arith.addf %25, %29 : vector<128x128xf32>
      %c0_17 = arith.constant 0 : index
      %c0_18 = arith.constant 0 : index
      %31 = vector.load %arg11[%c0_17, %c0_18] : memref<128x128xf32, #tpu.memory_space<vmem>>, vector<128x128xf32>
      tpu.vector_store %arg11[%c0_17, %c0_18], %30 {strides = array<i32>} : memref<128x128xf32, #tpu.memory_space<vmem>>, vector<128x128xf32>,
    } else {
    }
    %c0_i32_7 = arith.constant 0 : i32
    %17 = arith.cmpi eq, %arg2, %c0_i32_7 : i32
    %18 = arith.extui %17 : i1 to i32
    %c0_i32_8 = arith.constant 0 : i32
    %19 = arith.cmpi ne, %18, %c0_i32_8 : i32
    scf.if %19 {
      %c0 = arith.constant 0 : index
      %c0_11 = arith.constant 0 : index
      %25 = vector.load %arg12[%c0, %c0_11] : memref<128x128xf32, #tpu.memory_space<vmem>>, vector<128x128xf32>
      %c0_12 = arith.constant 0 : index
      %c0_13 = arith.constant 0 : index
      %26 = vector.load %arg11[%c0_12, %c0_13] : memref<128x128xf32, #tpu.memory_space<vmem>>, vector<128x128xf32>
      %27 = arith.truncf %26 : vector<128x128xf32> to vector<128x128xbf16>
      %c0_14 = arith.constant 0 : index
      %c0_15 = arith.constant 0 : index
      %c0_16 = arith.constant 0 : index
      %28 = vector.load %arg7[%c0_14, %c0_15, %c0_16] : memref<1x128x128xbf16, #tpu.memory_space<vmem>>, vector<1x128x128xbf16>
      %29 = vector.shape_cast %28 : vector<1x128x128xbf16> to vector<128x128xbf16>
      %cst = arith.constant dense<0.000000e+00> : vector<128x128xf32>
      %30 = tpu.matmul %27, %29, %cst {dimension_numbers = #tpu.dot_dimension_numbers<[1], [0], [0], [1], [0, 0, 1, 1], [], []>} : vector<128x128xbf16>, vector<128x128xbf16>, vector<128x128xf32> -> vector<128x128xf32>
      %31 = arith.addf %25, %30 : vector<128x128xf32>
      %c0_17 = arith.constant 0 : index
      %c0_18 = arith.constant 0 : index
      %32 = vector.load %arg12[%c0_17, %c0_18] : memref<128x128xf32, #tpu.memory_space<vmem>>, vector<128x128xf32>
      tpu.vector_store %arg12[%c0_17, %c0_18], %31 {strides = array<i32>} : memref<128x128xf32, #tpu.memory_space<vmem>>, vector<128x128xf32>,
    } else {
    }
    %c3_i32 = arith.constant 3 : i32
    %20 = arith.cmpi eq, %arg1, %c3_i32 : i32
    %c0_i32_9 = arith.constant 0 : i32
    %21 = arith.cmpi eq, %arg2, %c0_i32_9 : i32
    %22 = arith.andi %20, %21 : i1
    %23 = arith.extui %22 : i1 to i32
    %c0_i32_10 = arith.constant 0 : i32
    %24 = arith.cmpi ne, %23, %c0_i32_10 : i32
    scf.if %24 {
      %c0 = arith.constant 0 : index
      %c0_11 = arith.constant 0 : index
      %25 = vector.load %arg12[%c0, %c0_11] : memref<128x128xf32, #tpu.memory_space<vmem>>, vector<128x128xf32>
      %cst = arith.constant 0.000000e+00 : f32
      %26 = vector.broadcast %cst : f32 to vector<128x128xf32>
      %27 = arith.maximumf %25, %26 : vector<128x128xf32>
      %28 = arith.truncf %27 : vector<128x128xf32> to vector<128x128xbf16>
      %c0_12 = arith.constant 0 : index
      %c0_13 = arith.constant 0 : index
      %29 = vector.load %arg10[%c0_12, %c0_13] : memref<128x128xbf16, #tpu.memory_space<vmem>>, vector<128x128xbf16>
      tpu.vector_store %arg10[%c0_12, %c0_13], %28 {strides = array<i32>} : memref<128x128xbf16, #tpu.memory_space<vmem>>, vector<128x128xbf16>,
    } else {
    }
    return
  }
  func.func @transform_0(%arg0: i32, %arg1: i32, %arg2: i32, %arg3: memref<4xi32, #tpu.memory_space<smem>>) -> (i32, i32, i32) {
    %c0_i32 = arith.constant 0 : i32
    return %arg1, %arg0, %arg2 : i32, i32, i32
  }
  func.func @transform_1(%arg0: i32, %arg1: i32, %arg2: i32, %arg3: memref<4xi32, #tpu.memory_space<smem>>) -> (i32, i32) {
    %c0_i32 = arith.constant 0 : i32
    %c0_i32_0 = arith.constant 0 : i32
    return %arg2, %c0_i32 : i32, i32
  }
  func.func @transform_2(%arg0: i32, %arg1: i32, %arg2: i32, %arg3: memref<4xi32, #tpu.memory_space<smem>>) -> (i32, i32) {
    %c0_i32 = arith.constant 0 : i32
    %c0_i32_0 = arith.constant 0 : i32
    return %arg0, %c0_i32 : i32, i32
  }
  func.func @transform_3(%arg0: i32, %arg1: i32, %arg2: i32, %arg3: memref<4xi32, #tpu.memory_space<smem>>) -> (i32, i32, i32) {
    %c0_i32 = arith.constant 0 : i32
    %c0_i32_0 = arith.constant 0 : i32
    %c0_i32_1 = arith.constant 0 : i32
    return %arg1, %c0_i32, %c0_i32_0 : i32, i32, i32
  }
  func.func @transform_4(%arg0: i32, %arg1: i32, %arg2: i32, %arg3: memref<4xi32, #tpu.memory_space<smem>>) -> (i32, i32) {
    %c0_i32 = arith.constant 0 : i32
    %c0_i32_0 = arith.constant 0 : i32
    %c0_i32_1 = arith.constant 0 : i32
    return %c0_i32, %c0_i32_0 : i32, i32
  }
  func.func @transform_5(%arg0: i32, %arg1: i32, %arg2: i32, %arg3: memref<4xi32, #tpu.memory_space<smem>>) -> (i32, i32) {
    %c0_i32 = arith.constant 0 : i32
    %c0_i32_0 = arith.constant 0 : i32
    %c0_i32_1 = arith.constant 0 : i32
    return %c0_i32, %c0_i32_0 : i32, i32
  }
  func.func @transform_6(%arg0: i32, %arg1: i32, %arg2: i32, %arg3: memref<4xi32, #tpu.memory_space<smem>>) -> (i32, i32) {
    %c0_i32 = arith.constant 0 : i32
    %c0_i32_0 = arith.constant 0 : i32
    return %arg0, %c0_i32 : i32, i32
  }
}

</mosaic_0001>

<llo_original>
// kernel: tpu_custom_call.1
$region0: #{tpu_custom_call.1}
  #allocation0 [shape = 'u32[]', space=smem, size = 0x4, offset = 0x4, fixed_abs, tag = 'smem constant byte address 0x4 - core index']
  #allocation1 [shape = 'u32[144,128]{1,0:T(1,128)}', space=vmem, size = 0x12000, scoped, tag = 'internal scratch']
  #allocation2 [shape = 'f32[128,128]{1,0:T(8,128)}', space=vmem, size = 0x10000, scoped, tag = 'scratch operand']
  #allocation3 [shape = 'f32[128,128]{1,0:T(8,128)}', space=vmem, size = 0x10000, scoped, tag = 'scratch operand']
  #allocation4 [shape = 's32[1]{0}', space=sflag, size = 0x4, scoped, tag = 'scoped memory for tpu_custom_call.1']
  #allocation5 [shape = 'u8[512]{0}', space=smem, size = 0x200, scoped, tag = 'prefetched SMEM operand 0']
  %s0 = inlined_call_operand.hbm [shape: s32[4], index: 0, kind: input, shape index: {}]
  %s1 = inlined_call_operand.hbm [shape: bf16[4,128,128], index: 1, kind: input, shape index: {}]
  %s2 = inlined_call_operand.hbm [shape: bf16[128,128], index: 2, kind: input, shape index: {}]
  %s3 = inlined_call_operand.hbm [shape: bf16[128,128], index: 3, kind: input, shape index: {}]
  %s4 = inlined_call_operand.hbm [shape: bf16[4,128,128], index: 4, kind: input, shape index: {}]
  %s5 = inlined_call_operand.hbm [shape: bf16[128,128], index: 5, kind: input, shape index: {}]
  %s6 = inlined_call_operand.hbm [shape: f32[1,128], index: 6, kind: input, shape index: {}]
  %s7 = inlined_call_operand.hbm [shape: bf16[128,128], index: 7, kind: output, shape index: {}]
  %s8 = sld [smem:[#allocation0]]
  $region101: #{tpu_custom_call.1} parent=0
    _
  %s10 = ssub.s32 1, %s8
  %s11 = scalar_select 0, %s10, %s8
  %13 = dma.hbm_to_smem %s0, 16, [#allocation5], [#allocation4]
  %14 = dma.done [#allocation4], 16
  %15 = sfence
  $region1: #{tpu_custom_call.1} parent=0
    #allocation6 [shape = 'u8[65536]{0}', space=vmem, size = 0x10000, scoped, tag = 'input window, operand 1']
    #allocation7 [shape = 's32[2]{0}', space=sflag, size = 0x8, scoped, tag = 'scoped memory for tpu_custom_call.1']
    #allocation8 [shape = 's32[2]{0}', space=sflag, size = 0x8, scoped, tag = 'scoped memory for tpu_custom_call.1']
    #allocation9 [shape = 'u8[32768]{0}', space=vmem, size = 0x8000, scoped, tag = 'input window, operand 2, single buffered']
    #allocation10 [shape = 's32[1]{0}', space=sflag, size = 0x4, scoped, tag = 'scoped memory for tpu_custom_call.1']
    #allocation11 [shape = 'u8[32768]{0}', space=vmem, size = 0x8000, scoped, tag = 'input window, operand 3, single buffered']
    #allocation12 [shape = 'u8[65536]{0}', space=vmem, size = 0x10000, scoped, tag = 'input window, operand 4']
    #allocation13 [shape = 's32[2]{0}', space=sflag, size = 0x8, scoped, tag = 'scoped memory for tpu_custom_call.1']
    #allocation14 [shape = 'u8[32768]{0}', space=vmem, size = 0x8000, scoped, tag = 'input window, operand 5, single buffered']
    #allocation15 [shape = 'u8[512]{0}', space=vmem, size = 0x400, scoped, tag = 'input window, operand 6, single buffered']
    #allocation16 [shape = 's32[1]{0}', space=sflag, size = 0x4, scoped, tag = 'scoped memory for tpu_custom_call.1']
    #allocation17 [shape = 'u8[32768]{0}', space=vmem, size = 0x8000, scoped, tag = 'output window, operand 0, single buffered']
    %16 = vsyncpa [#allocation7], 0
    %s17 = scalar_lea.sflag [#allocation7], 1
    %18 = vsyncpa %s17, 0
    %19 = vsyncpa [#allocation10], 0
    %20 = vsyncpa [#allocation13], 0
    %s21 = scalar_lea.sflag [#allocation13], 1
    %22 = vsyncpa %s21, 0
    %23 = vsyncpa [#allocation16], 0
    %24 = vsyncpa [#allocation8], 0
    loop: start=0, step=1, limit=6
    $region2: #{tpu_custom_call.1} parent=1 // loop_pre_header
      _
    $region3: #{tpu_custom_call.1} parent=1 // loop_header
      %s26 = sphi 0, %s30
      %p27 = scmp.ge.s32.totalorder %s26, 6
      %s33 = sphi 0, %s52
      %s34 = sphi 0, %s48
      %s35 = sphi 0, %s44
      %s36 = sphi 0, %s33
      %s37 = sphi 0, %s34
      %s38 = sphi 0, %s35
      %s39 = sphi 0, %s36
      %s40 = sphi 0, %s37
      %s41 = sphi 0, %s38
      %s59 = sphi 0, %s61
      %s62 = sphi 0, %s59
      %s63 = sphi 0, %s62
      %s79 = sphi 0, %s63
      %s85 = sphi 0, %s87
      %s88 = sphi 0, %s85
      %s89 = sphi 0, %s88
      %s105 = sphi 0, %s89
      %s111 = sphi 0, %s113
      %s114 = sphi 0, %s111
      %s115 = sphi 0, %s114
      %s131 = sphi 0, %s115
      %s137 = sphi 0, %s139
      %s140 = sphi 0, %s137
      %s141 = sphi 0, %s140
      %s157 = sphi 0, %s141
      %s161 = sphi 0, %s161
      %s163 = sphi 0, %s161
      %s164 = sphi 0, %s163
      %s178 = sphi 0, %s164
      %s182 = sphi 0, %s182
      %s184 = sphi 0, %s182
      %s185 = sphi 0, %s184
      %s199 = sphi 0, %s185
      %s205 = sphi 0, %s207
      %s208 = sphi 0, %s205
      %s209 = sphi 0, %s208
      %s225 = sphi 0, %s209
    $region4: #{tpu_custom_call.1} parent=1 // loop_header_branch
      %29 = sbr.rel (%p27) target = $region8
    $region5: #{tpu_custom_call.1} parent=1 // loop_body
      %s31 = ssub.s32 %s26, 1
      %s32 = ssub.s32 %s26, 2
      %s42 = sadd.s32 1, %s35
      %p43 = scmp.ge.s32.totalorder %s42, 1
      %s44 = scalar_select %p43, 0, %s42
      %s45 = sadd.s32 1, %s34
      %s46 = scalar_select %p43, %s45, %s34
      %p47 = scmp.ge.s32.totalorder %s46, 4
      %s48 = scalar_select %p47, 0, %s46
      %s49 = sadd.s32 1, %s33
      %s50 = scalar_select %p47, %s49, %s33
      %p51 = scmp.ge.s32.totalorder %s50, 1
      %s52 = scalar_select %p51, 0, %s50
      %s53 = ssub.s32 %s34, %s48
      %s54 = ssub.s32 %s33, %s52
      %s55 = sor.u32 %s53, %s54
      %s56 = ssub.s32 %s35, %s44
      %s57 = sor.u32 %s55, %s56
      %p58 = scmp.eq.s32.totalorder %s57, 0
      %s60 = sadd.s32 %s59, 1
      %s61 = scalar_select %p58, %s59, %s60
      %p64 = pneg %p58
      %p65 = scmp.eq.s32.totalorder %s26, 3
      %p66 = por %p64, %p65
      %p67 = scmp.ne.s32.totalorder %s59, %s62
      %p68 = scmp.eq.s32.totalorder %s26, 0
      %p69 = por %p67, %p68
      %p70 = scmp.ne.s32.totalorder %s59, %s62
      %p71 = scmp.eq.s32.totalorder %s31, 3
      %p72 = por %p70, %p71
      %p73 = scmp.ne.s32.totalorder %s62, %s63
      %p74 = scmp.eq.s32.totalorder %s31, 0
      %p75 = por %p73, %p74
      %p76 = scmp.ne.s32.totalorder %s62, %s63
      %p77 = scmp.eq.s32.totalorder %s32, 3
      %p78 = por %p76, %p77
      %p80 = scmp.ne.s32.totalorder %s63, %s79
      %p81 = scmp.eq.s32.totalorder %s32, 0
      %p82 = por %p80, %p81
      %s83 = ssub.s32 %s35, %s44
      %p84 = scmp.eq.s32.totalorder %s83, 0
      %s86 = sadd.s32 %s85, 1
      %s87 = scalar_select %p84, %s85, %s86
      %p90 = pneg %p84
      %p91 = scmp.eq.s32.totalorder %s26, 3
      %p92 = por %p90, %p91
      %p93 = scmp.ne.s32.totalorder %s85, %s88
      %p94 = scmp.eq.s32.totalorder %s26, 0
      %p95 = por %p93, %p94
      %p96 = scmp.ne.s32.totalorder %s85, %s88
      %p97 = scmp.eq.s32.totalorder %s31, 3
      %p98 = por %p96, %p97
      %p99 = scmp.ne.s32.totalorder %s88, %s89
      %p100 = scmp.eq.s32.totalorder %s31, 0
      %p101 = por %p99, %p100
      %p102 = scmp.ne.s32.totalorder %s88, %s89
      %p103 = scmp.eq.s32.totalorder %s32, 3
      %p104 = por %p102, %p103
      %p106 = scmp.ne.s32.totalorder %s89, %s105
      %p107 = scmp.eq.s32.totalorder %s32, 0
      %p108 = por %p106, %p107
      %s109 = ssub.s32 %s33, %s52
      %p110 = scmp.eq.s32.totalorder %s109, 0
      %s112 = sadd.s32 %s111, 1
      %s113 = scalar_select %p110, %s111, %s112
      %p116 = pneg %p110
      %p117 = scmp.eq.s32.totalorder %s26, 3
      %p118 = por %p116, %p117
      %p119 = scmp.ne.s32.totalorder %s111, %s114
      %p120 = scmp.eq.s32.totalorder %s26, 0
      %p121 = por %p119, %p120
      %p122 = scmp.ne.s32.totalorder %s111, %s114
      %p123 = scmp.eq.s32.totalorder %s31, 3
      %p124 = por %p122, %p123
      %p125 = scmp.ne.s32.totalorder %s114, %s115
      %p126 = scmp.eq.s32.totalorder %s31, 0
      %p127 = por %p125, %p126
      %p128 = scmp.ne.s32.totalorder %s114, %s115
      %p129 = scmp.eq.s32.totalorder %s32, 3
      %p130 = por %p128, %p129
      %p132 = scmp.ne.s32.totalorder %s115, %s131
      %p133 = scmp.eq.s32.totalorder %s32, 0
      %p134 = por %p132, %p133
      %s135 = ssub.s32 %s34, %s48
      %p136 = scmp.eq.s32.totalorder %s135, 0
      %s138 = sadd.s32 %s137, 1
      %s139 = scalar_select %p136, %s137, %s138
      %p142 = pneg %p136
      %p143 = scmp.eq.s32.totalorder %s26, 3
      %p144 = por %p142, %p143
      %p145 = scmp.ne.s32.totalorder %s137, %s140
      %p146 = scmp.eq.s32.totalorder %s26, 0
      %p147 = por %p145, %p146
      %p148 = scmp.ne.s32.totalorder %s137, %s140
      %p149 = scmp.eq.s32.totalorder %s31, 3
      %p150 = por %p148, %p149
      %p151 = scmp.ne.s32.totalorder %s140, %s141
      %p152 = scmp.eq.s32.totalorder %s31, 0
      %p153 = por %p151, %p152
      %p154 = scmp.ne.s32.totalorder %s140, %s141
      %p155 = scmp.eq.s32.totalorder %s32, 3
      %p156 = por %p154, %p155
      %p158 = scmp.ne.s32.totalorder %s141, %s157
      %p159 = scmp.eq.s32.totalorder %s32, 0
      %p160 = por %p158, %p159
      %s162 = sadd.s32 %s161, 1
      %p165 = scmp.eq.s32.totalorder %s26, 3
      %p166 = scmp.ne.s32.totalorder %s161, %s163
      %p167 = scmp.eq.s32.totalorder %s26, 0
      %p168 = por %p166, %p167
      %p169 = scmp.ne.s32.totalorder %s161, %s163
      %p170 = scmp.eq.s32.totalorder %s31, 3
      %p171 = por %p169, %p170
      %p172 = scmp.ne.s32.totalorder %s163, %s164
      %p173 = scmp.eq.s32.totalorder %s31, 0
      %p174 = por %p172, %p173
      %p175 = scmp.ne.s32.totalorder %s163, %s164
      %p176 = scmp.eq.s32.totalorder %s32, 3
      %p177 = por %p175, %p176
      %p179 = scmp.ne.s32.totalorder %s164, %s178
      %p180 = scmp.eq.s32.totalorder %s32, 0
      %p181 = por %p179, %p180
      %s183 = sadd.s32 %s182, 1
      %p186 = scmp.eq.s32.totalorder %s26, 3
      %p187 = scmp.ne.s32.totalorder %s182, %s184
      %p188 = scmp.eq.s32.totalorder %s26, 0
      %p189 = por %p187, %p188
      %p190 = scmp.ne.s32.totalorder %s182, %s184
      %p191 = scmp.eq.s32.totalorder %s31, 3
      %p192 = por %p190, %p191
      %p193 = scmp.ne.s32.totalorder %s184, %s185
      %p194 = scmp.eq.s32.totalorder %s31, 0
      %p195 = por %p193, %p194
      %p196 = scmp.ne.s32.totalorder %s184, %s185
      %p197 = scmp.eq.s32.totalorder %s32, 3
      %p198 = por %p196, %p197
      %p200 = scmp.ne.s32.totalorder %s185, %s199
      %p201 = scmp.eq.s32.totalorder %s32, 0
      %p202 = por %p200, %p201
      %s203 = ssub.s32 %s33, %s52
      %p204 = scmp.eq.s32.totalorder %s203, 0
      %s206 = sadd.s32 %s205, 1
      %s207 = scalar_select %p204, %s205, %s206
      %p210 = pneg %p204
      %p211 = scmp.eq.s32.totalorder %s26, 3
      %p212 = por %p210, %p211
      %p213 = scmp.ne.s32.totalorder %s205, %s208
      %p214 = scmp.eq.s32.totalorder %s26, 0
      %p215 = por %p213, %p214
      %p216 = scmp.ne.s32.totalorder %s205, %s208
      %p217 = scmp.eq.s32.totalorder %s31, 3
      %p218 = por %p216, %p217
      %p219 = scmp.ne.s32.totalorder %s208, %s209
      %p220 = scmp.eq.s32.totalorder %s31, 0
      %p221 = por %p219, %p220
      %p222 = scmp.ne.s32.totalorder %s208, %s209
      %p223 = scmp.eq.s32.totalorder %s32, 3
      %p224 = por %p222, %p223
      %p226 = scmp.ne.s32.totalorder %s209, %s225
      %p227 = scmp.eq.s32.totalorder %s32, 0
      %p228 = por %p226, %p227
      %p229 = scmp.le.s32.totalorder 1, %s26
      %p230 = scmp.lt.s32.totalorder %s26, 5
      %p231 = pnand %p229, %p230
      %p232 = pneg %p231
      // Predicated region
      $region9: #{tpu_custom_call.1} parent=5 // pred_check
        _
      $region10: #{tpu_custom_call.1} parent=5 // pred_check_branch
        %234 = sbr.rel (%p231) target = $region12
      $region11: #{tpu_custom_call.1} parent=5 // pred_region
        %s235 = ssub.s32 %s26, 1
        // Predicated region
        $region13: #{tpu_custom_call.1} parent=11 // pred_check
          %p236 = pneg %p101
        $region14: #{tpu_custom_call.1} parent=11 // pred_check_branch
          %238 = sbr.rel (%p236) target = $region16
        $region15: #{tpu_custom_call.1} parent=11 // pred_region
          %s239 = smul.u32 16, %s38
          %s241 = ssub.s32 1024, 1024
          %242 = vsyncadd [#allocation10], %s241
          %s243 = smul.addr %s239, 64
          %s244 = scalar_lea.hbm %s2, %s243
          %s245 = sshll.u32 [#allocation9], 4
          %s246 = int_to_ptr.vmem [resolvable:$true] %s245
          %251 = dma.hbm_to_vmem [thread:$0]  %s244, 1024, %s246, [#allocation10], 64, 64, 4
        $region16: #{tpu_custom_call.1} parent=11 // pred_fallthru
          _
        // Predicated region
        $region17: #{tpu_custom_call.1} parent=11 // pred_check
          %p252 = pneg %p127
        $region18: #{tpu_custom_call.1} parent=11 // pred_check_branch
          %254 = sbr.rel (%p252) target = $region20
        $region19: #{tpu_custom_call.1} parent=11 // pred_region
          %s255 = smul.u32 16, %s36
          %s257 = ssub.s32 1024, 1024
          %258 = vsyncadd [#allocation10], %s257
          %s259 = smul.addr %s255, 64
          %s260 = scalar_lea.hbm %s3, %s259
          %s261 = sshll.u32 [#allocation11], 4
          %s262 = int_to_ptr.vmem [resolvable:$true] %s261
          %267 = dma.hbm_to_vmem [thread:$0]  %s260, 1024, %s262, [#allocation10], 64, 64, 4
        $region20: #{tpu_custom_call.1} parent=11 // pred_fallthru
          _
        // Predicated region
        $region21: #{tpu_custom_call.1} parent=11 // pred_check
          %p268 = pneg %p174
        $region22: #{tpu_custom_call.1} parent=11 // pred_check_branch
          %270 = sbr.rel (%p268) target = $region24
        $region23: #{tpu_custom_call.1} parent=11 // pred_region
          %s272 = ssub.s32 1024, 1024
          %273 = vsyncadd [#allocation13], %s272
          %s274 = sshll.u32 [#allocation14], 4
          %s275 = int_to_ptr.vmem [resolvable:$true] %s274
          %280 = dma.hbm_to_vmem [thread:$0]  %s5, 1024, %s275, [#allocation13], 64, 64, 4
        $region24: #{tpu_custom_call.1} parent=11 // pred_fallthru
          _
        // Predicated region
        $region25: #{tpu_custom_call.1} parent=11 // pred_check
          %p281 = pneg %p195
        $region26: #{tpu_custom_call.1} parent=11 // pred_check_branch
          %283 = sbr.rel (%p281) target = $region28
        $region27: #{tpu_custom_call.1} parent=11 // pred_region
          %s285 = ssub.s32 16, 16
          %286 = vsyncadd [#allocation16], %s285
          %s288 = sshll.u32 [#allocation15], 4
          %s289 = int_to_ptr.vmem [resolvable:$true] %s288
          %291 = dma.hbm_to_vmem [thread:$0]  %s6, 16, %s289, [#allocation16]
        $region28: #{tpu_custom_call.1} parent=11 // pred_fallthru
          _
      $region12: #{tpu_custom_call.1} parent=5 // pred_fallthru
        _
      %p292 = scmp.lt.s32.totalorder %s26, 4
      // Predicated region
      $region29: #{tpu_custom_call.1} parent=5 // pred_check
        %p293 = pneg %p292
      $region30: #{tpu_custom_call.1} parent=5 // pred_check_branch
        %295 = sbr.rel (%p293) target = $region32
      $region31: #{tpu_custom_call.1} parent=5 // pred_region
        // Predicated region
        $region33: #{tpu_custom_call.1} parent=31 // pred_check
          %p296 = pneg %p69
        $region34: #{tpu_custom_call.1} parent=31 // pred_check_branch
          %298 = sbr.rel (%p296) target = $region36
        $region35: #{tpu_custom_call.1} parent=31 // pred_region
          %s299 = sand.u32 %s59, 1
          %s300 = scalar_lea.sflag [#allocation7], %s299
          %s301 = sand.u32 %s59, 1
          %s302 = smul.addr %s301, 64
          %s303 = scalar_lea.vmem [#allocation6], %s302
          %s304 = smul.u32 16, %s33
          %s306 = ssub.s32 1024, 1024
          %307 = vsyncadd %s300, %s306
          %s308 = sadd.s32 %s35, %s304
          %s309 = smul.addr %s34, 16
          %s310 = sadd.s32 %s308, %s309
          %s311 = smul.addr %s310, 64
          %s312 = scalar_lea.hbm %s1, %s311
          %s313 = sshll.u32 %s303, 4
          %s314 = int_to_ptr.vmem [resolvable:$true] %s313
          %319 = dma.hbm_to_vmem [thread:$0]  %s312, 1024, %s314, %s300, 64, 64, 4
        $region36: #{tpu_custom_call.1} parent=31 // pred_fallthru
          _
        // Predicated region
        $region37: #{tpu_custom_call.1} parent=31 // pred_check
          %p320 = pneg %p147
        $region38: #{tpu_custom_call.1} parent=31 // pred_check_branch
          %322 = sbr.rel (%p320) target = $region40
        $region39: #{tpu_custom_call.1} parent=31 // pred_region
          %s323 = sand.u32 %s26, 1
          %s324 = scalar_lea.sflag [#allocation13], %s323
          %s325 = sand.u32 %s137, 1
          %s326 = smul.addr %s325, 64
          %s327 = scalar_lea.vmem [#allocation12], %s326
          %s329 = ssub.s32 1024, 1024
          %330 = vsyncadd %s324, %s329
          %s331 = smul.addr %s34, 16
          %s332 = smul.addr %s331, 64
          %s333 = scalar_lea.hbm %s4, %s332
          %s334 = sshll.u32 %s327, 4
          %s335 = int_to_ptr.vmem [resolvable:$true] %s334
          %340 = dma.hbm_to_vmem [thread:$0]  %s333, 1024, %s335, %s324, 64, 64, 4
        $region40: #{tpu_custom_call.1} parent=31 // pred_fallthru
          _
      $region32: #{tpu_custom_call.1} parent=5 // pred_fallthru
        _
      %p341 = scmp.le.s32.totalorder 1, %s26
      %p342 = scmp.lt.s32.totalorder %s26, 5
      %p343 = pnand %p341, %p342
      %p344 = pneg %p343
      // Predicated region
      $region41: #{tpu_custom_call.1} parent=5 // pred_check
        _
      $region42: #{tpu_custom_call.1} parent=5 // pred_check_branch
        %346 = sbr.rel (%p343) target = $region44
      $region43: #{tpu_custom_call.1} parent=5 // pred_region
        %s347 = ssub.s32 %s26, 1
        %s348 = sand.u32 %s62, 1
        %s349 = scalar_lea.sflag [#allocation7], %s348
        %s350 = sand.u32 %s62, 1
        %s351 = smul.addr %s350, 64
        %s352 = scalar_lea.vmem [#allocation6], %s351
        // Predicated region
        $region45: #{tpu_custom_call.1} parent=43 // pred_check
          %p353 = pneg %p75
        $region46: #{tpu_custom_call.1} parent=43 // pred_check_branch
          %355 = sbr.rel (%p353) target = $region48
        $region47: #{tpu_custom_call.1} parent=43 // pred_region
          %356 = dma.done %s349, 1024
        $region48: #{tpu_custom_call.1} parent=43 // pred_fallthru
          _
        // Predicated region
        $region49: #{tpu_custom_call.1} parent=43 // pred_check
          %p357 = pneg %p101
        $region50: #{tpu_custom_call.1} parent=43 // pred_check_branch
          %359 = sbr.rel (%p357) target = $region52
        $region51: #{tpu_custom_call.1} parent=43 // pred_region
          %360 = dma.done [#allocation10], 1024
        $region52: #{tpu_custom_call.1} parent=43 // pred_fallthru
          _
        // Predicated region
        $region53: #{tpu_custom_call.1} parent=43 // pred_check
          %p361 = pneg %p127
        $region54: #{tpu_custom_call.1} parent=43 // pred_check_branch
          %363 = sbr.rel (%p361) target = $region56
        $region55: #{tpu_custom_call.1} parent=43 // pred_region
          %364 = dma.done [#allocation10], 1024
        $region56: #{tpu_custom_call.1} parent=43 // pred_fallthru
          _
        %s365 = sand.u32 %s31, 1
        %s366 = scalar_lea.sflag [#allocation13], %s365
        %s367 = sand.u32 %s140, 1
        %s368 = smul.addr %s367, 64
        %s369 = scalar_lea.vmem [#allocation12], %s368
        // Predicated region
        $region57: #{tpu_custom_call.1} parent=43 // pred_check
          %p370 = pneg %p153
        $region58: #{tpu_custom_call.1} parent=43 // pred_check_branch
          %372 = sbr.rel (%p370) target = $region60
        $region59: #{tpu_custom_call.1} parent=43 // pred_region
          %373 = dma.done %s366, 1024
        $region60: #{tpu_custom_call.1} parent=43 // pred_fallthru
          _
        // Predicated region
        $region61: #{tpu_custom_call.1} parent=43 // pred_check
          %p374 = pneg %p174
        $region62: #{tpu_custom_call.1} parent=43 // pred_check_branch
          %376 = sbr.rel (%p374) target = $region64
        $region63: #{tpu_custom_call.1} parent=43 // pred_region
          %377 = dma.done [#allocation13], 1024
        $region64: #{tpu_custom_call.1} parent=43 // pred_fallthru
          _
        // Predicated region
        $region65: #{tpu_custom_call.1} parent=43 // pred_check
          %p378 = pneg %p195
        $region66: #{tpu_custom_call.1} parent=43 // pred_check_branch
          %380 = sbr.rel (%p378) target = $region68
        $region67: #{tpu_custom_call.1} parent=43 // pred_region
          %381 = dma.done [#allocation16], 16
        $region68: #{tpu_custom_call.1} parent=43 // pred_fallthru
          _
        %s382 = sand.u32 %s62, 1
        %s383 = scalar_lea.sflag [#allocation7], %s382
        %s384 = sand.u32 %s62, 1
        %s385 = smul.addr %s384, 64
        %s386 = scalar_lea.vmem [#allocation6], %s385
        %p387 = pneg %p75
        %p388 = pneg %p72
        %p389 = pneg %p101
        %p390 = pneg %p98
        %p391 = pneg %p127
        %p392 = pneg %p124
        %s393 = sand.u32 %s31, 1
        %s394 = scalar_lea.sflag [#allocation13], %s393
        %s395 = sand.u32 %s140, 1
        %s396 = smul.addr %s395, 64
        %s397 = scalar_lea.vmem [#allocation12], %s396
        %p398 = pneg %p153
        %p399 = pneg %p150
        %p400 = pneg %p174
        %p401 = pneg %p171
        %p402 = pneg %p195
        %p403 = pneg %p192
        %p404 = pneg %p221
        %p405 = pneg %p218
        %s406 = smul.u32 16, %s36
        %s407 = smul.u32 16, %s38
        %s408 = smul.u32 16, %s36
        %s409 = smul.u32 16, %s36
        %p411 = scmp.eq.s32.totalorder %s37, 0
        %p412 = scmp.eq.s32.totalorder %s38, 0
        %p413 = pnand %p411, %p412
        %p414 = pneg %p413
        // Predicated region
        $region69: #{tpu_custom_call.1} parent=43 // pred_check
          _
        $region70: #{tpu_custom_call.1} parent=43 // pred_check_branch
          %416 = sbr.rel (%p413) target = $region72
        $region71: #{tpu_custom_call.1} parent=43 // pred_region
          %v417 = vld [vmem:[#allocation11] sm:$0xf]
          %v418 = vld [vmem:[#allocation11 + $0x4] sm:$0xf]
          %v419 = vld [vmem:[#allocation11 + $0x8] sm:$0xf]
          %v420 = vld [vmem:[#allocation11 + $0xc] sm:$0xf]
          %v421 = vld [vmem:[#allocation11 + $0x10] sm:$0xf]
          %v422 = vld [vmem:[#allocation11 + $0x14] sm:$0xf]
          %v423 = vld [vmem:[#allocation11 + $0x18] sm:$0xf]
          %v424 = vld [vmem:[#allocation11 + $0x1c] sm:$0xf]
          %v425 = vld [vmem:[#allocation11 + $0x20] sm:$0xf]
          %v426 = vld [vmem:[#allocation11 + $0x24] sm:$0xf]
          %v427 = vld [vmem:[#allocation11 + $0x28] sm:$0xf]
          %v428 = vld [vmem:[#allocation11 + $0x2c] sm:$0xf]
          %v429 = vld [vmem:[#allocation11 + $0x30] sm:$0xf]
          %v430 = vld [vmem:[#allocation11 + $0x34] sm:$0xf]
          %v431 = vld [vmem:[#allocation11 + $0x38] sm:$0xf]
          %v432 = vld [vmem:[#allocation11 + $0x3c] sm:$0xf]
          %v433 = vld [vmem:[#allocation14] sm:$0xf]
          %v434 = vld [vmem:[#allocation14 + $0x4] sm:$0xf]
          %v435 = vld [vmem:[#allocation14 + $0x8] sm:$0xf]
          %v436 = vld [vmem:[#allocation14 + $0xc] sm:$0xf]
          %v437 = vld [vmem:[#allocation14 + $0x10] sm:$0xf]
          %v438 = vld [vmem:[#allocation14 + $0x14] sm:$0xf]
          %v439 = vld [vmem:[#allocation14 + $0x18] sm:$0xf]
          %v440 = vld [vmem:[#allocation14 + $0x1c] sm:$0xf]
          %v441 = vld [vmem:[#allocation14 + $0x20] sm:$0xf]
          %v442 = vld [vmem:[#allocation14 + $0x24] sm:$0xf]
          %v443 = vld [vmem:[#allocation14 + $0x28] sm:$0xf]
          %v444 = vld [vmem:[#allocation14 + $0x2c] sm:$0xf]
          %v445 = vld [vmem:[#allocation14 + $0x30] sm:$0xf]
          %v446 = vld [vmem:[#allocation14 + $0x34] sm:$0xf]
          %v447 = vld [vmem:[#allocation14 + $0x38] sm:$0xf]
          %v448 = vld [vmem:[#allocation14 + $0x3c] sm:$0xf]
          %v449 = vld [vmem:[#allocation15] sm:$0x1]
          %v451 = vlaneseq
          %v452 = vshrl.u32 %v451, 7
          %v453 = vsub.s32 0, %v452
          %v454 = vrot.slane %v449, %v453
          %v472 = vunpack.c.l.b16 %v417
          %v473 = vunpack.c.l.b16 %v418
          %v474 = vunpack.c.l.b16 %v419
          %v475 = vunpack.c.l.b16 %v420
          %v476 = vunpack.c.l.b16 %v421
          %v477 = vunpack.c.l.b16 %v422
          %v478 = vunpack.c.l.b16 %v423
          %v479 = vunpack.c.l.b16 %v424
          %v480 = vunpack.c.l.b16 %v425
          %v481 = vunpack.c.l.b16 %v426
          %v482 = vunpack.c.l.b16 %v427
          %v483 = vunpack.c.l.b16 %v428
          %v484 = vunpack.c.l.b16 %v429
          %v485 = vunpack.c.l.b16 %v430
          %v486 = vunpack.c.l.b16 %v431
          %v487 = vunpack.c.l.b16 %v432
          %v488 = vpack.c.b16 %v473, %v472
          %v489 = vpack.c.b16 %v475, %v474
          %v490 = vpack.c.b16 %v477, %v476
          %v491 = vpack.c.b16 %v479, %v478
          %v492 = vpack.c.b16 %v481, %v480
          %v493 = vpack.c.b16 %v483, %v482
          %v494 = vpack.c.b16 %v485, %v484
          %v495 = vpack.c.b16 %v487, %v486
          %v520 = vunpack.c.l.b16 %v433
          %v521 = vunpack.c.l.b16 %v434
          %v522 = vunpack.c.l.b16 %v435
          %v523 = vunpack.c.l.b16 %v436
          %v524 = vunpack.c.l.b16 %v437
          %v525 = vunpack.c.l.b16 %v438
          %v526 = vunpack.c.l.b16 %v439
          %v527 = vunpack.c.l.b16 %v440
          %v528 = vunpack.c.l.b16 %v441
          %v529 = vunpack.c.l.b16 %v442
          %v530 = vunpack.c.l.b16 %v443
          %v531 = vunpack.c.l.b16 %v444
          %v532 = vunpack.c.l.b16 %v445
          %v533 = vunpack.c.l.b16 %v446
          %v534 = vunpack.c.l.b16 %v447
          %v535 = vunpack.c.l.b16 %v448
          %v536 = vpack.c.b16 %v521, %v520
          %v537 = vpack.c.b16 %v523, %v522
          %v538 = vpack.c.b16 %v525, %v524
          %v539 = vpack.c.b16 %v527, %v526
          %v540 = vpack.c.b16 %v529, %v528
          %v541 = vpack.c.b16 %v531, %v530
          %v542 = vpack.c.b16 %v533, %v532
          %v543 = vpack.c.b16 %v535, %v534
          %552 = vmatprep.subr.bf16.mxu0 0
          %553 = vmatpush1.bf16.msra.mxu0 %v536
          %554 = vmatprep.subr.bf16.mxu0 0
          %555 = vmatpush1.bf16.msra.mxu0 %v537
          %556 = vmatprep.subr.bf16.mxu0 0
          %557 = vmatpush1.bf16.msra.mxu0 %v538
          %558 = vmatprep.subr.bf16.mxu0 0
          %559 = vmatpush1.bf16.msra.mxu0 %v539
          %560 = vmatprep.subr.bf16.mxu0 0
          %561 = vmatpush1.bf16.msra.mxu0 %v540
          %562 = vmatprep.subr.bf16.mxu0 0
          %563 = vmatpush1.bf16.msra.mxu0 %v541
          %564 = vmatprep.subr.bf16.mxu0 0
          %565 = vmatpush1.bf16.msra.mxu0 %v542
          %566 = vmatprep.subr.bf16.mxu0 0
          %567 = vmatpush1.bf16.msra.mxu0 %v543
          %568 = vmatprep.subr.bf16.mxu0 0
          %569 = vmatpush1.bf16.msra.mxu0 0
          %570 = vmatprep.subr.bf16.mxu0 0
          %571 = vmatpush1.bf16.msra.mxu0 0
          %572 = vmatprep.subr.bf16.mxu0 0
          %573 = vmatpush1.bf16.msra.mxu0 0
          %574 = vmatprep.subr.bf16.mxu0 0
          %575 = vmatpush1.bf16.msra.mxu0 0
          %576 = vmatprep.subr.bf16.mxu0 0
          %577 = vmatpush1.bf16.msra.mxu0 0
          %578 = vmatprep.subr.bf16.mxu0 0
          %579 = vmatpush1.bf16.msra.mxu0 0
          %580 = vmatprep.subr.bf16.mxu0 0
          %581 = vmatpush1.bf16.msra.mxu0 0
          %582 = vmatprep.subr.bf16.mxu0 0
          %583 = vmatpush1.bf16.msra.mxu0 0
          %584 = vmatprep.mubr.bf16.mxu0 0
          %585 = vmatmul.mubr.bf16.gmra.mrb[0].mxu0 %v488
          %v586 = vpop.f32.mrb[0].mxu0
          %v587 = vadd.f32 %v454, %v586
          %v588 = vpop.f32.mrb[0].mxu0
          %v589 = vpop.f32.mrb[0].mxu0
          %v590 = vadd.f32 %v454, %v589
          %v591 = vpop.f32.mrb[0].mxu0
          %592 = vmatprep.mubr.bf16.mxu0 0
          %593 = vmatmul.mubr.bf16.gmra.mrb[0].mxu0 %v489
          %v594 = vpop.f32.mrb[0].mxu0
          %v595 = vadd.f32 %v454, %v594
          %v596 = vpop.f32.mrb[0].mxu0
          %v597 = vpop.f32.mrb[0].mxu0
          %v598 = vadd.f32 %v454, %v597
          %v599 = vpop.f32.mrb[0].mxu0
          %600 = vmatprep.mubr.bf16.mxu0 0
          %601 = vmatmul.mubr.bf16.gmra.mrb[0].mxu0 %v490
          %v602 = vpop.f32.mrb[0].mxu0
          %v603 = vadd.f32 %v454, %v602
          %v604 = vpop.f32.mrb[0].mxu0
          %v605 = vpop.f32.mrb[0].mxu0
          %v606 = vadd.f32 %v454, %v605
          %v607 = vpop.f32.mrb[0].mxu0
          %608 = vmatprep.mubr.bf16.mxu0 0
          %609 = vmatmul.mubr.bf16.gmra.mrb[0].mxu0 %v491
          %v610 = vpop.f32.mrb[0].mxu0
          %v611 = vadd.f32 %v454, %v610
          %v612 = vpop.f32.mrb[0].mxu0
          %v613 = vpop.f32.mrb[0].mxu0
          %v614 = vadd.f32 %v454, %v613
          %v615 = vpop.f32.mrb[0].mxu0
          %616 = vmatprep.mubr.bf16.mxu0 0
          %617 = vmatmul.mubr.bf16.gmra.mrb[0].mxu0 %v492
          %v618 = vpop.f32.mrb[0].mxu0
          %v619 = vadd.f32 %v454, %v618
          %v620 = vpop.f32.mrb[0].mxu0
          %v621 = vpop.f32.mrb[0].mxu0
          %v622 = vadd.f32 %v454, %v621
          %v623 = vpop.f32.mrb[0].mxu0
          %624 = vmatprep.mubr.bf16.mxu0 0
          %625 = vmatmul.mubr.bf16.gmra.mrb[0].mxu0 %v493
          %v626 = vpop.f32.mrb[0].mxu0
          %v627 = vadd.f32 %v454, %v626
          %v628 = vpop.f32.mrb[0].mxu0
          %v629 = vpop.f32.mrb[0].mxu0
          %v630 = vadd.f32 %v454, %v629
          %v631 = vpop.f32.mrb[0].mxu0
          %632 = vmatprep.mubr.bf16.mxu0 0
          %633 = vmatmul.mubr.bf16.gmra.mrb[0].mxu0 %v494
          %v634 = vpop.f32.mrb[0].mxu0
          %v635 = vadd.f32 %v454, %v634
          %v636 = vpop.f32.mrb[0].mxu0
          %v637 = vpop.f32.mrb[0].mxu0
          %v638 = vadd.f32 %v454, %v637
          %v639 = vpop.f32.mrb[0].mxu0
          %640 = vmatprep.mubr.bf16.mxu0 0
          %641 = vmatmul.mubr.bf16.gmra.mrb[0].mxu0 %v495
          %v642 = vpop.f32.mrb[0].mxu0
          %v643 = vadd.f32 %v454, %v642
          %v644 = vpop.f32.mrb[0].mxu0
          %v645 = vpop.f32.mrb[0].mxu0
          %v646 = vadd.f32 %v454, %v645
          %v647 = vpop.f32.mrb[0].mxu0
          %648 = vdwg.mxu0
          %649 = vst [vmem:[#allocation3] sm:$0xff] %v587
          %650 = vst [vmem:[#allocation3 + $0x8] sm:$0xff] %v590
          %651 = vst [vmem:[#allocation3 + $0x10] sm:$0xff] %v595
          %652 = vst [vmem:[#allocation3 + $0x18] sm:$0xff] %v598
          %653 = vst [vmem:[#allocation3 + $0x20] sm:$0xff] %v603
          %654 = vst [vmem:[#allocation3 + $0x28] sm:$0xff] %v606
          %655 = vst [vmem:[#allocation3 + $0x30] sm:$0xff] %v611
          %656 = vst [vmem:[#allocation3 + $0x38] sm:$0xff] %v614
          %657 = vst [vmem:[#allocation3 + $0x40] sm:$0xff] %v619
          %658 = vst [vmem:[#allocation3 + $0x48] sm:$0xff] %v622
          %659 = vst [vmem:[#allocation3 + $0x50] sm:$0xff] %v627
          %660 = vst [vmem:[#allocation3 + $0x58] sm:$0xff] %v630
          %661 = vst [vmem:[#allocation3 + $0x60] sm:$0xff] %v635
          %662 = vst [vmem:[#allocation3 + $0x68] sm:$0xff] %v638
          %663 = vst [vmem:[#allocation3 + $0x70] sm:$0xff] %v643
          %664 = vst [vmem:[#allocation3 + $0x78] sm:$0xff] %v646
        $region72: #{tpu_custom_call.1} parent=43 // pred_fallthru
          _
        // Predicated region
        $region73: #{tpu_custom_call.1} parent=43 // pred_check
          %p665 = pneg %p412
        $region74: #{tpu_custom_call.1} parent=43 // pred_check_branch
          %667 = sbr.rel (%p665) target = $region76
        $region75: #{tpu_custom_call.1} parent=43 // pred_region
          %668 = vst [vmem:[#allocation2] sm:$0xff] 0.0
          %669 = vst [vmem:[#allocation2 + $0x8] sm:$0xff] 0.0
          %670 = vst [vmem:[#allocation2 + $0x10] sm:$0xff] 0.0
          %671 = vst [vmem:[#allocation2 + $0x18] sm:$0xff] 0.0
          %672 = vst [vmem:[#allocation2 + $0x20] sm:$0xff] 0.0
          %673 = vst [vmem:[#allocation2 + $0x28] sm:$0xff] 0.0
          %674 = vst [vmem:[#allocation2 + $0x30] sm:$0xff] 0.0
          %675 = vst [vmem:[#allocation2 + $0x38] sm:$0xff] 0.0
          %676 = vst [vmem:[#allocation2 + $0x40] sm:$0xff] 0.0
          %677 = vst [vmem:[#allocation2 + $0x48] sm:$0xff] 0.0
          %678 = vst [vmem:[#allocation2 + $0x50] sm:$0xff] 0.0
          %679 = vst [vmem:[#allocation2 + $0x58] sm:$0xff] 0.0
          %680 = vst [vmem:[#allocation2 + $0x60] sm:$0xff] 0.0
          %681 = vst [vmem:[#allocation2 + $0x68] sm:$0xff] 0.0
          %682 = vst [vmem:[#allocation2 + $0x70] sm:$0xff] 0.0
          %683 = vst [vmem:[#allocation2 + $0x78] sm:$0xff] 0.0
        $region76: #{tpu_custom_call.1} parent=43 // pred_fallthru
          _
        %s684 = sadd.s32 %s37, %s36
        %s685 = sadd.s32 %s684, %s38
        %s686 = sld [smem:[#allocation5 + %s685]]
        %p687 = scmp.gt.s32.totalorder %s686, 0
        // Predicated region
        $region77: #{tpu_custom_call.1} parent=43 // pred_check
          %p688 = pneg %p687
        $region78: #{tpu_custom_call.1} parent=43 // pred_check_branch
          %690 = sbr.rel (%p688) target = $region80
        $region79: #{tpu_custom_call.1} parent=43 // pred_region
          %v691 = vld [vmem:[#allocation2] sm:$0xff]
          %v692 = vld [vmem:[#allocation2 + $0x8] sm:$0xff]
          %v693 = vld [vmem:[#allocation2 + $0x10] sm:$0xff]
          %v694 = vld [vmem:[#allocation2 + $0x18] sm:$0xff]
          %v695 = vld [vmem:[#allocation2 + $0x20] sm:$0xff]
          %v696 = vld [vmem:[#allocation2 + $0x28] sm:$0xff]
          %v697 = vld [vmem:[#allocation2 + $0x30] sm:$0xff]
          %v698 = vld [vmem:[#allocation2 + $0x38] sm:$0xff]
          %v699 = vld [vmem:[#allocation2 + $0x40] sm:$0xff]
          %v700 = vld [vmem:[#allocation2 + $0x48] sm:$0xff]
          %v701 = vld [vmem:[#allocation2 + $0x50] sm:$0xff]
          %v702 = vld [vmem:[#allocation2 + $0x58] sm:$0xff]
          %v703 = vld [vmem:[#allocation2 + $0x60] sm:$0xff]
          %v704 = vld [vmem:[#allocation2 + $0x68] sm:$0xff]
          %v705 = vld [vmem:[#allocation2 + $0x70] sm:$0xff]
          %v706 = vld [vmem:[#allocation2 + $0x78] sm:$0xff]
          %v707 = vld [vmem:[%s352] sm:$0xf]
          %v708 = vld [vmem:[%s352 + $0x4] sm:$0xf]
          %v709 = vld [vmem:[%s352 + $0x8] sm:$0xf]
          %v710 = vld [vmem:[%s352 + $0xc] sm:$0xf]
          %v711 = vld [vmem:[%s352 + $0x10] sm:$0xf]
          %v712 = vld [vmem:[%s352 + $0x14] sm:$0xf]
          %v713 = vld [vmem:[%s352 + $0x18] sm:$0xf]
          %v714 = vld [vmem:[%s352 + $0x1c] sm:$0xf]
          %v715 = vld [vmem:[%s352 + $0x20] sm:$0xf]
          %v716 = vld [vmem:[%s352 + $0x24] sm:$0xf]
          %v717 = vld [vmem:[%s352 + $0x28] sm:$0xf]
          %v718 = vld [vmem:[%s352 + $0x2c] sm:$0xf]
          %v719 = vld [vmem:[%s352 + $0x30] sm:$0xf]
          %v720 = vld [vmem:[%s352 + $0x34] sm:$0xf]
          %v721 = vld [vmem:[%s352 + $0x38] sm:$0xf]
          %v722 = vld [vmem:[%s352 + $0x3c] sm:$0xf]
          %v723 = vld [vmem:[#allocation9] sm:$0xf]
          %v724 = vld [vmem:[#allocation9 + $0x4] sm:$0xf]
          %v725 = vld [vmem:[#allocation9 + $0x8] sm:$0xf]
          %v726 = vld [vmem:[#allocation9 + $0xc] sm:$0xf]
          %v727 = vld [vmem:[#allocation9 + $0x10] sm:$0xf]
          %v728 = vld [vmem:[#allocation9 + $0x14] sm:$0xf]
          %v729 = vld [vmem:[#allocation9 + $0x18] sm:$0xf]
          %v730 = vld [vmem:[#allocation9 + $0x1c] sm:$0xf]
          %v731 = vld [vmem:[#allocation9 + $0x20] sm:$0xf]
          %v732 = vld [vmem:[#allocation9 + $0x24] sm:$0xf]
          %v733 = vld [vmem:[#allocation9 + $0x28] sm:$0xf]
          %v734 = vld [vmem:[#allocation9 + $0x2c] sm:$0xf]
          %v735 = vld [vmem:[#allocation9 + $0x30] sm:$0xf]
          %v736 = vld [vmem:[#allocation9 + $0x34] sm:$0xf]
          %v737 = vld [vmem:[#allocation9 + $0x38] sm:$0xf]
          %v738 = vld [vmem:[#allocation9 + $0x3c] sm:$0xf]
          %v755 = vunpack.c.l.b16 %v707
          %v756 = vunpack.c.l.b16 %v708
          %v757 = vunpack.c.l.b16 %v709
          %v758 = vunpack.c.l.b16 %v710
          %v759 = vunpack.c.l.b16 %v711
          %v760 = vunpack.c.l.b16 %v712
          %v761 = vunpack.c.l.b16 %v713
          %v762 = vunpack.c.l.b16 %v714
          %v763 = vunpack.c.l.b16 %v715
          %v764 = vunpack.c.l.b16 %v716
          %v765 = vunpack.c.l.b16 %v717
          %v766 = vunpack.c.l.b16 %v718
          %v767 = vunpack.c.l.b16 %v719
          %v768 = vunpack.c.l.b16 %v720
          %v769 = vunpack.c.l.b16 %v721
          %v770 = vunpack.c.l.b16 %v722
          %v771 = vpack.c.b16 %v756, %v755
          %v772 = vpack.c.b16 %v758, %v757
          %v773 = vpack.c.b16 %v760, %v759
          %v774 = vpack.c.b16 %v762, %v761
          %v775 = vpack.c.b16 %v764, %v763
          %v776 = vpack.c.b16 %v766, %v765
          %v777 = vpack.c.b16 %v768, %v767
          %v778 = vpack.c.b16 %v770, %v769
          %v803 = vunpack.c.l.b16 %v723
          %v804 = vunpack.c.l.b16 %v724
          %v805 = vunpack.c.l.b16 %v725
          %v806 = vunpack.c.l.b16 %v726
          %v807 = vunpack.c.l.b16 %v727
          %v808 = vunpack.c.l.b16 %v728
          %v809 = vunpack.c.l.b16 %v729
          %v810 = vunpack.c.l.b16 %v730
          %v811 = vunpack.c.l.b16 %v731
          %v812 = vunpack.c.l.b16 %v732
          %v813 = vunpack.c.l.b16 %v733
          %v814 = vunpack.c.l.b16 %v734
          %v815 = vunpack.c.l.b16 %v735
          %v816 = vunpack.c.l.b16 %v736
          %v817 = vunpack.c.l.b16 %v737
          %v818 = vunpack.c.l.b16 %v738
          %v819 = vpack.c.b16 %v804, %v803
          %v820 = vpack.c.b16 %v806, %v805
          %v821 = vpack.c.b16 %v808, %v807
          %v822 = vpack.c.b16 %v810, %v809
          %v823 = vpack.c.b16 %v812, %v811
          %v824 = vpack.c.b16 %v814, %v813
          %v825 = vpack.c.b16 %v816, %v815
          %v826 = vpack.c.b16 %v818, %v817
          %835 = vmatprep.subr.bf16.mxu0 0
          %836 = vmatpush1.bf16.msra.mxu0 %v819
          %837 = vmatprep.subr.bf16.mxu0 0
          %838 = vmatpush1.bf16.msra.mxu0 %v820
          %839 = vmatprep.subr.bf16.mxu0 0
          %840 = vmatpush1.bf16.msra.mxu0 %v821
          %841 = vmatprep.subr.bf16.mxu0 0
          %842 = vmatpush1.bf16.msra.mxu0 %v822
          %843 = vmatprep.subr.bf16.mxu0 0
          %844 = vmatpush1.bf16.msra.mxu0 %v823
          %845 = vmatprep.subr.bf16.mxu0 0
          %846 = vmatpush1.bf16.msra.mxu0 %v824
          %847 = vmatprep.subr.bf16.mxu0 0
          %848 = vmatpush1.bf16.msra.mxu0 %v825
          %849 = vmatprep.subr.bf16.mxu0 0
          %850 = vmatpush1.bf16.msra.mxu0 %v826
          %851 = vmatprep.subr.bf16.mxu0 0
          %852 = vmatpush1.bf16.msra.mxu0 0
          %853 = vmatprep.subr.bf16.mxu0 0
          %854 = vmatpush1.bf16.msra.mxu0 0
          %855 = vmatprep.subr.bf16.mxu0 0
          %856 = vmatpush1.bf16.msra.mxu0 0
          %857 = vmatprep.subr.bf16.mxu0 0
          %858 = vmatpush1.bf16.msra.mxu0 0
          %859 = vmatprep.subr.bf16.mxu0 0
          %860 = vmatpush1.bf16.msra.mxu0 0
          %861 = vmatprep.subr.bf16.mxu0 0
          %862 = vmatpush1.bf16.msra.mxu0 0
          %863 = vmatprep.subr.bf16.mxu0 0
          %864 = vmatpush1.bf16.msra.mxu0 0
          %865 = vmatprep.subr.bf16.mxu0 0
          %866 = vmatpush1.bf16.msra.mxu0 0
          %867 = vmatprep.mubr.bf16.mxu0 0
          %868 = vmatmul.mubr.bf16.gmra.mrb[0].mxu0 %v771
          %v869 = vpop.f32.mrb[0].mxu0
          %v870 = vadd.f32 0.0, %v869
          %v871 = vpop.f32.mrb[0].mxu0
          %v872 = vpop.f32.mrb[0].mxu0
          %v873 = vadd.f32 0.0, %v872
          %v874 = vpop.f32.mrb[0].mxu0
          %875 = vmatprep.mubr.bf16.mxu0 0
          %876 = vmatmul.mubr.bf16.gmra.mrb[0].mxu0 %v772
          %v877 = vpop.f32.mrb[0].mxu0
          %v878 = vadd.f32 0.0, %v877
          %v879 = vpop.f32.mrb[0].mxu0
          %v880 = vpop.f32.mrb[0].mxu0
          %v881 = vadd.f32 0.0, %v880
          %v882 = vpop.f32.mrb[0].mxu0
          %883 = vmatprep.mubr.bf16.mxu0 0
          %884 = vmatmul.mubr.bf16.gmra.mrb[0].mxu0 %v773
          %v885 = vpop.f32.mrb[0].mxu0
          %v886 = vadd.f32 0.0, %v885
          %v887 = vpop.f32.mrb[0].mxu0
          %v888 = vpop.f32.mrb[0].mxu0
          %v889 = vadd.f32 0.0, %v888
          %v890 = vpop.f32.mrb[0].mxu0
          %891 = vmatprep.mubr.bf16.mxu0 0
          %892 = vmatmul.mubr.bf16.gmra.mrb[0].mxu0 %v774
          %v893 = vpop.f32.mrb[0].mxu0
          %v894 = vadd.f32 0.0, %v893
          %v895 = vpop.f32.mrb[0].mxu0
          %v896 = vpop.f32.mrb[0].mxu0
          %v897 = vadd.f32 0.0, %v896
          %v898 = vpop.f32.mrb[0].mxu0
          %899 = vmatprep.mubr.bf16.mxu0 0
          %900 = vmatmul.mubr.bf16.gmra.mrb[0].mxu0 %v775
          %v901 = vpop.f32.mrb[0].mxu0
          %v902 = vadd.f32 0.0, %v901
          %v903 = vpop.f32.mrb[0].mxu0
          %v904 = vpop.f32.mrb[0].mxu0
          %v905 = vadd.f32 0.0, %v904
          %v906 = vpop.f32.mrb[0].mxu0
          %907 = vmatprep.mubr.bf16.mxu0 0
          %908 = vmatmul.mubr.bf16.gmra.mrb[0].mxu0 %v776
          %v909 = vpop.f32.mrb[0].mxu0
          %v910 = vadd.f32 0.0, %v909
          %v911 = vpop.f32.mrb[0].mxu0
          %v912 = vpop.f32.mrb[0].mxu0
          %v913 = vadd.f32 0.0, %v912
          %v914 = vpop.f32.mrb[0].mxu0
          %915 = vmatprep.mubr.bf16.mxu0 0
          %916 = vmatmul.mubr.bf16.gmra.mrb[0].mxu0 %v777
          %v917 = vpop.f32.mrb[0].mxu0
          %v918 = vadd.f32 0.0, %v917
          %v919 = vpop.f32.mrb[0].mxu0
          %v920 = vpop.f32.mrb[0].mxu0
          %v921 = vadd.f32 0.0, %v920
          %v922 = vpop.f32.mrb[0].mxu0
          %923 = vmatprep.mubr.bf16.mxu0 0
          %924 = vmatmul.mubr.bf16.gmra.mrb[0].mxu0 %v778
          %v925 = vpop.f32.mrb[0].mxu0
          %v926 = vadd.f32 0.0, %v925
          %v927 = vpop.f32.mrb[0].mxu0
          %v928 = vpop.f32.mrb[0].mxu0
          %v929 = vadd.f32 0.0, %v928
          %v930 = vpop.f32.mrb[0].mxu0
          %931 = vdwg.mxu0
          %v932 = vadd.f32 %v691, %v870
          %v933 = vadd.f32 %v692, %v873
          %v934 = vadd.f32 %v693, %v878
          %v935 = vadd.f32 %v694, %v881
          %v936 = vadd.f32 %v695, %v886
          %v937 = vadd.f32 %v696, %v889
          %v938 = vadd.f32 %v697, %v894
          %v939 = vadd.f32 %v698, %v897
          %v940 = vadd.f32 %v699, %v902
          %v941 = vadd.f32 %v700, %v905
          %v942 = vadd.f32 %v701, %v910
          %v943 = vadd.f32 %v702, %v913
          %v944 = vadd.f32 %v703, %v918
          %v945 = vadd.f32 %v704, %v921
          %v946 = vadd.f32 %v705, %v926
          %v947 = vadd.f32 %v706, %v929
          %948 = vst [vmem:[#allocation2] sm:$0xff] %v932
          %949 = vst [vmem:[#allocation2 + $0x8] sm:$0xff] %v933
          %950 = vst [vmem:[#allocation2 + $0x10] sm:$0xff] %v934
          %951 = vst [vmem:[#allocation2 + $0x18] sm:$0xff] %v935
          %952 = vst [vmem:[#allocation2 + $0x20] sm:$0xff] %v936
          %953 = vst [vmem:[#allocation2 + $0x28] sm:$0xff] %v937
          %954 = vst [vmem:[#allocation2 + $0x30] sm:$0xff] %v938
          %955 = vst [vmem:[#allocation2 + $0x38] sm:$0xff] %v939
          %956 = vst [vmem:[#allocation2 + $0x40] sm:$0xff] %v940
          %957 = vst [vmem:[#allocation2 + $0x48] sm:$0xff] %v941
          %958 = vst [vmem:[#allocation2 + $0x50] sm:$0xff] %v942
          %959 = vst [vmem:[#allocation2 + $0x58] sm:$0xff] %v943
          %960 = vst [vmem:[#allocation2 + $0x60] sm:$0xff] %v944
          %961 = vst [vmem:[#allocation2 + $0x68] sm:$0xff] %v945
          %962 = vst [vmem:[#allocation2 + $0x70] sm:$0xff] %v946
          %963 = vst [vmem:[#allocation2 + $0x78] sm:$0xff] %v947
        $region80: #{tpu_custom_call.1} parent=43 // pred_fallthru
          _
        // Predicated region
        $region81: #{tpu_custom_call.1} parent=43 // pred_check
          %p964 = pneg %p412
        $region82: #{tpu_custom_call.1} parent=43 // pred_check_branch
          %966 = sbr.rel (%p964) target = $region84
        $region83: #{tpu_custom_call.1} parent=43 // pred_region
          %v967 = vld [vmem:[#allocation3] sm:$0xff]
          %v968 = vld [vmem:[#allocation3 + $0x8] sm:$0xff]
          %v969 = vld [vmem:[#allocation3 + $0x10] sm:$0xff]
          %v970 = vld [vmem:[#allocation3 + $0x18] sm:$0xff]
          %v971 = vld [vmem:[#allocation3 + $0x20] sm:$0xff]
          %v972 = vld [vmem:[#allocation3 + $0x28] sm:$0xff]
          %v973 = vld [vmem:[#allocation3 + $0x30] sm:$0xff]
          %v974 = vld [vmem:[#allocation3 + $0x38] sm:$0xff]
          %v975 = vld [vmem:[#allocation3 + $0x40] sm:$0xff]
          %v976 = vld [vmem:[#allocation3 + $0x48] sm:$0xff]
          %v977 = vld [vmem:[#allocation3 + $0x50] sm:$0xff]
          %v978 = vld [vmem:[#allocation3 + $0x58] sm:$0xff]
          %v979 = vld [vmem:[#allocation3 + $0x60] sm:$0xff]
          %v980 = vld [vmem:[#allocation3 + $0x68] sm:$0xff]
          %v981 = vld [vmem:[#allocation3 + $0x70] sm:$0xff]
          %v982 = vld [vmem:[#allocation3 + $0x78] sm:$0xff]
          %v983 = vld [vmem:[#allocation2] sm:$0xff]
          %v984 = vld [vmem:[#allocation2 + $0x8] sm:$0xff]
          %v985 = vld [vmem:[#allocation2 + $0x10] sm:$0xff]
          %v986 = vld [vmem:[#allocation2 + $0x18] sm:$0xff]
          %v987 = vld [vmem:[#allocation2 + $0x20] sm:$0xff]
          %v988 = vld [vmem:[#allocation2 + $0x28] sm:$0xff]
          %v989 = vld [vmem:[#allocation2 + $0x30] sm:$0xff]
          %v990 = vld [vmem:[#allocation2 + $0x38] sm:$0xff]
          %v991 = vld [vmem:[#allocation2 + $0x40] sm:$0xff]
          %v992 = vld [vmem:[#allocation2 + $0x48] sm:$0xff]
          %v993 = vld [vmem:[#allocation2 + $0x50] sm:$0xff]
          %v994 = vld [vmem:[#allocation2 + $0x58] sm:$0xff]
          %v995 = vld [vmem:[#allocation2 + $0x60] sm:$0xff]
          %v996 = vld [vmem:[#allocation2 + $0x68] sm:$0xff]
          %v997 = vld [vmem:[#allocation2 + $0x70] sm:$0xff]
          %v998 = vld [vmem:[#allocation2 + $0x78] sm:$0xff]
          %v999 = vpack.c.bf16 %v984, %v983
          %v1000 = vpack.c.bf16 %v986, %v985
          %v1001 = vpack.c.bf16 %v988, %v987
          %v1002 = vpack.c.bf16 %v990, %v989
          %v1003 = vpack.c.bf16 %v992, %v991
          %v1004 = vpack.c.bf16 %v994, %v993
          %v1005 = vpack.c.bf16 %v996, %v995
          %v1006 = vpack.c.bf16 %v998, %v997
          %v1007 = vld [vmem:[%s369] sm:$0xf]
          %v1008 = vld [vmem:[%s369 + $0x4] sm:$0xf]
          %v1009 = vld [vmem:[%s369 + $0x8] sm:$0xf]
          %v1010 = vld [vmem:[%s369 + $0xc] sm:$0xf]
          %v1011 = vld [vmem:[%s369 + $0x10] sm:$0xf]
          %v1012 = vld [vmem:[%s369 + $0x14] sm:$0xf]
          %v1013 = vld [vmem:[%s369 + $0x18] sm:$0xf]
          %v1014 = vld [vmem:[%s369 + $0x1c] sm:$0xf]
          %v1015 = vld [vmem:[%s369 + $0x20] sm:$0xf]
          %v1016 = vld [vmem:[%s369 + $0x24] sm:$0xf]
          %v1017 = vld [vmem:[%s369 + $0x28] sm:$0xf]
          %v1018 = vld [vmem:[%s369 + $0x2c] sm:$0xf]
          %v1019 = vld [vmem:[%s369 + $0x30] sm:$0xf]
          %v1020 = vld [vmem:[%s369 + $0x34] sm:$0xf]
          %v1021 = vld [vmem:[%s369 + $0x38] sm:$0xf]
          %v1022 = vld [vmem:[%s369 + $0x3c] sm:$0xf]
          %v1039 = vunpack.c.l.b16 %v1007
          %v1040 = vunpack.c.l.b16 %v1008
          %v1041 = vunpack.c.l.b16 %v1009
          %v1042 = vunpack.c.l.b16 %v1010
          %v1043 = vunpack.c.l.b16 %v1011
          %v1044 = vunpack.c.l.b16 %v1012
          %v1045 = vunpack.c.l.b16 %v1013
          %v1046 = vunpack.c.l.b16 %v1014
          %v1047 = vunpack.c.l.b16 %v1015
          %v1048 = vunpack.c.l.b16 %v1016
          %v1049 = vunpack.c.l.b16 %v1017
          %v1050 = vunpack.c.l.b16 %v1018
          %v1051 = vunpack.c.l.b16 %v1019
          %v1052 = vunpack.c.l.b16 %v1020
          %v1053 = vunpack.c.l.b16 %v1021
          %v1054 = vunpack.c.l.b16 %v1022
          %v1055 = vpack.c.b16 %v1040, %v1039
          %v1056 = vpack.c.b16 %v1042, %v1041
          %v1057 = vpack.c.b16 %v1044, %v1043
          %v1058 = vpack.c.b16 %v1046, %v1045
          %v1059 = vpack.c.b16 %v1048, %v1047
          %v1060 = vpack.c.b16 %v1050, %v1049
          %v1061 = vpack.c.b16 %v1052, %v1051
          %v1062 = vpack.c.b16 %v1054, %v1053
          %1071 = vmatprep.subr.bf16.mxu0 0
          %1072 = vmatpush1.bf16.msra.mxu0 %v1055
          %1073 = vmatprep.subr.bf16.mxu0 0
          %1074 = vmatpush1.bf16.msra.mxu0 %v1056
          %1075 = vmatprep.subr.bf16.mxu0 0
          %1076 = vmatpush1.bf16.msra.mxu0 %v1057
          %1077 = vmatprep.subr.bf16.mxu0 0
          %1078 = vmatpush1.bf16.msra.mxu0 %v1058
          %1079 = vmatprep.subr.bf16.mxu0 0
          %1080 = vmatpush1.bf16.msra.mxu0 %v1059
          %1081 = vmatprep.subr.bf16.mxu0 0
          %1082 = vmatpush1.bf16.msra.mxu0 %v1060
          %1083 = vmatprep.subr.bf16.mxu0 0
          %1084 = vmatpush1.bf16.msra.mxu0 %v1061
          %1085 = vmatprep.subr.bf16.mxu0 0
          %1086 = vmatpush1.bf16.msra.mxu0 %v1062
          %1087 = vmatprep.subr.bf16.mxu0 0
          %1088 = vmatpush1.bf16.msra.mxu0 0
          %1089 = vmatprep.subr.bf16.mxu0 0
          %1090 = vmatpush1.bf16.msra.mxu0 0
          %1091 = vmatprep.subr.bf16.mxu0 0
          %1092 = vmatpush1.bf16.msra.mxu0 0
          %1093 = vmatprep.subr.bf16.mxu0 0
          %1094 = vmatpush1.bf16.msra.mxu0 0
          %1095 = vmatprep.subr.bf16.mxu0 0
          %1096 = vmatpush1.bf16.msra.mxu0 0
          %1097 = vmatprep.subr.bf16.mxu0 0
          %1098 = vmatpush1.bf16.msra.mxu0 0
          %1099 = vmatprep.subr.bf16.mxu0 0
          %1100 = vmatpush1.bf16.msra.mxu0 0
          %1101 = vmatprep.subr.bf16.mxu0 0
          %1102 = vmatpush1.bf16.msra.mxu0 0
          %1103 = vmatprep.mubr.bf16.mxu0 0
          %1104 = vmatmul.mubr.bf16.gmra.mrb[0].mxu0 %v999
          %v1105 = vpop.f32.mrb[0].mxu0
          %v1106 = vadd.f32 0.0, %v1105
          %v1107 = vpop.f32.mrb[0].mxu0
          %v1108 = vpop.f32.mrb[0].mxu0
          %v1109 = vadd.f32 0.0, %v1108
          %v1110 = vpop.f32.mrb[0].mxu0
          %1111 = vmatprep.mubr.bf16.mxu0 0
          %1112 = vmatmul.mubr.bf16.gmra.mrb[0].mxu0 %v1000
          %v1113 = vpop.f32.mrb[0].mxu0
          %v1114 = vadd.f32 0.0, %v1113
          %v1115 = vpop.f32.mrb[0].mxu0
          %v1116 = vpop.f32.mrb[0].mxu0
          %v1117 = vadd.f32 0.0, %v1116
          %v1118 = vpop.f32.mrb[0].mxu0
          %1119 = vmatprep.mubr.bf16.mxu0 0
          %1120 = vmatmul.mubr.bf16.gmra.mrb[0].mxu0 %v1001
          %v1121 = vpop.f32.mrb[0].mxu0
          %v1122 = vadd.f32 0.0, %v1121
          %v1123 = vpop.f32.mrb[0].mxu0
          %v1124 = vpop.f32.mrb[0].mxu0
          %v1125 = vadd.f32 0.0, %v1124
          %v1126 = vpop.f32.mrb[0].mxu0
          %1127 = vmatprep.mubr.bf16.mxu0 0
          %1128 = vmatmul.mubr.bf16.gmra.mrb[0].mxu0 %v1002
          %v1129 = vpop.f32.mrb[0].mxu0
          %v1130 = vadd.f32 0.0, %v1129
          %v1131 = vpop.f32.mrb[0].mxu0
          %v1132 = vpop.f32.mrb[0].mxu0
          %v1133 = vadd.f32 0.0, %v1132
          %v1134 = vpop.f32.mrb[0].mxu0
          %1135 = vmatprep.mubr.bf16.mxu0 0
          %1136 = vmatmul.mubr.bf16.gmra.mrb[0].mxu0 %v1003
          %v1137 = vpop.f32.mrb[0].mxu0
          %v1138 = vadd.f32 0.0, %v1137
          %v1139 = vpop.f32.mrb[0].mxu0
          %v1140 = vpop.f32.mrb[0].mxu0
          %v1141 = vadd.f32 0.0, %v1140
          %v1142 = vpop.f32.mrb[0].mxu0
          %1143 = vmatprep.mubr.bf16.mxu0 0
          %1144 = vmatmul.mubr.bf16.gmra.mrb[0].mxu0 %v1004
          %v1145 = vpop.f32.mrb[0].mxu0
          %v1146 = vadd.f32 0.0, %v1145
          %v1147 = vpop.f32.mrb[0].mxu0
          %v1148 = vpop.f32.mrb[0].mxu0
          %v1149 = vadd.f32 0.0, %v1148
          %v1150 = vpop.f32.mrb[0].mxu0
          %1151 = vmatprep.mubr.bf16.mxu0 0
          %1152 = vmatmul.mubr.bf16.gmra.mrb[0].mxu0 %v1005
          %v1153 = vpop.f32.mrb[0].mxu0
          %v1154 = vadd.f32 0.0, %v1153
          %v1155 = vpop.f32.mrb[0].mxu0
          %v1156 = vpop.f32.mrb[0].mxu0
          %v1157 = vadd.f32 0.0, %v1156
          %v1158 = vpop.f32.mrb[0].mxu0
          %1159 = vmatprep.mubr.bf16.mxu0 0
          %1160 = vmatmul.mubr.bf16.gmra.mrb[0].mxu0 %v1006
          %v1161 = vpop.f32.mrb[0].mxu0
          %v1162 = vadd.f32 0.0, %v1161
          %v1163 = vpop.f32.mrb[0].mxu0
          %v1164 = vpop.f32.mrb[0].mxu0
          %v1165 = vadd.f32 0.0, %v1164
          %v1166 = vpop.f32.mrb[0].mxu0
          %1167 = vdwg.mxu0
          %v1168 = vadd.f32 %v967, %v1106
          %v1169 = vadd.f32 %v968, %v1109
          %v1170 = vadd.f32 %v969, %v1114
          %v1171 = vadd.f32 %v970, %v1117
          %v1172 = vadd.f32 %v971, %v1122
          %v1173 = vadd.f32 %v972, %v1125
          %v1174 = vadd.f32 %v973, %v1130
          %v1175 = vadd.f32 %v974, %v1133
          %v1176 = vadd.f32 %v975, %v1138
          %v1177 = vadd.f32 %v976, %v1141
          %v1178 = vadd.f32 %v977, %v1146
          %v1179 = vadd.f32 %v978, %v1149
          %v1180 = vadd.f32 %v979, %v1154
          %v1181 = vadd.f32 %v980, %v1157
          %v1182 = vadd.f32 %v981, %v1162
          %v1183 = vadd.f32 %v982, %v1165
          %1184 = vst [vmem:[#allocation3] sm:$0xff] %v1168
          %1185 = vst [vmem:[#allocation3 + $0x8] sm:$0xff] %v1169
          %1186 = vst [vmem:[#allocation3 + $0x10] sm:$0xff] %v1170
          %1187 = vst [vmem:[#allocation3 + $0x18] sm:$0xff] %v1171
          %1188 = vst [vmem:[#allocation3 + $0x20] sm:$0xff] %v1172
          %1189 = vst [vmem:[#allocation3 + $0x28] sm:$0xff] %v1173
          %1190 = vst [vmem:[#allocation3 + $0x30] sm:$0xff] %v1174
          %1191 = vst [vmem:[#allocation3 + $0x38] sm:$0xff] %v1175
          %1192 = vst [vmem:[#allocation3 + $0x40] sm:$0xff] %v1176
          %1193 = vst [vmem:[#allocation3 + $0x48] sm:$0xff] %v1177
          %1194 = vst [vmem:[#allocation3 + $0x50] sm:$0xff] %v1178
          %1195 = vst [vmem:[#allocation3 + $0x58] sm:$0xff] %v1179
          %1196 = vst [vmem:[#allocation3 + $0x60] sm:$0xff] %v1180
          %1197 = vst [vmem:[#allocation3 + $0x68] sm:$0xff] %v1181
          %1198 = vst [vmem:[#allocation3 + $0x70] sm:$0xff] %v1182
          %1199 = vst [vmem:[#allocation3 + $0x78] sm:$0xff] %v1183
        $region84: #{tpu_custom_call.1} parent=43 // pred_fallthru
          _
        %p1200 = scmp.eq.s32.totalorder %s37, 3
        %p1201 = pnand %p1200, %p412
        %p1202 = pneg %p1201
        // Predicated region
        $region85: #{tpu_custom_call.1} parent=43 // pred_check
          _
        $region86: #{tpu_custom_call.1} parent=43 // pred_check_branch
          %1204 = sbr.rel (%p1201) target = $region88
        $region87: #{tpu_custom_call.1} parent=43 // pred_region
          %v1205 = vld [vmem:[#allocation3] sm:$0xff]
          %v1206 = vld [vmem:[#allocation3 + $0x8] sm:$0xff]
          %v1207 = vld [vmem:[#allocation3 + $0x10] sm:$0xff]
          %v1208 = vld [vmem:[#allocation3 + $0x18] sm:$0xff]
          %v1209 = vld [vmem:[#allocation3 + $0x20] sm:$0xff]
          %v1210 = vld [vmem:[#allocation3 + $0x28] sm:$0xff]
          %v1211 = vld [vmem:[#allocation3 + $0x30] sm:$0xff]
          %v1212 = vld [vmem:[#allocation3 + $0x38] sm:$0xff]
          %v1213 = vld [vmem:[#allocation3 + $0x40] sm:$0xff]
          %v1214 = vld [vmem:[#allocation3 + $0x48] sm:$0xff]
          %v1215 = vld [vmem:[#allocation3 + $0x50] sm:$0xff]
          %v1216 = vld [vmem:[#allocation3 + $0x58] sm:$0xff]
          %v1217 = vld [vmem:[#allocation3 + $0x60] sm:$0xff]
          %v1218 = vld [vmem:[#allocation3 + $0x68] sm:$0xff]
          %v1219 = vld [vmem:[#allocation3 + $0x70] sm:$0xff]
          %v1220 = vld [vmem:[#allocation3 + $0x78] sm:$0xff]
          %v1221 = vmax.f32 %v1205, 0.0
          %v1222 = vmax.f32 %v1206, 0.0
          %v1223 = vmax.f32 %v1207, 0.0
          %v1224 = vmax.f32 %v1208, 0.0
          %v1225 = vmax.f32 %v1209, 0.0
          %v1226 = vmax.f32 %v1210, 0.0
          %v1227 = vmax.f32 %v1211, 0.0
          %v1228 = vmax.f32 %v1212, 0.0
          %v1229 = vmax.f32 %v1213, 0.0
          %v1230 = vmax.f32 %v1214, 0.0
          %v1231 = vmax.f32 %v1215, 0.0
          %v1232 = vmax.f32 %v1216, 0.0
          %v1233 = vmax.f32 %v1217, 0.0
          %v1234 = vmax.f32 %v1218, 0.0
          %v1235 = vmax.f32 %v1219, 0.0
          %v1236 = vmax.f32 %v1220, 0.0
          %v1237 = vpack.c.bf16 %v1222, %v1221
          %v1238 = vpack.c.bf16 %v1224, %v1223
          %v1239 = vpack.c.bf16 %v1226, %v1225
          %v1240 = vpack.c.bf16 %v1228, %v1227
          %v1241 = vpack.c.bf16 %v1230, %v1229
          %v1242 = vpack.c.bf16 %v1232, %v1231
          %v1243 = vpack.c.bf16 %v1234, %v1233
          %v1244 = vpack.c.bf16 %v1236, %v1235
          %v1253 = vunpack.c.l.b16 %v1237
          %v1254 = vunpack.c.h.b16 %v1237
          %v1255 = vunpack.c.l.b16 %v1238
          %v1256 = vunpack.c.h.b16 %v1238
          %v1257 = vunpack.c.l.b16 %v1239
          %v1258 = vunpack.c.h.b16 %v1239
          %v1259 = vunpack.c.l.b16 %v1240
          %v1260 = vunpack.c.h.b16 %v1240
          %v1261 = vunpack.c.l.b16 %v1241
          %v1262 = vunpack.c.h.b16 %v1241
          %v1263 = vunpack.c.l.b16 %v1242
          %v1264 = vunpack.c.h.b16 %v1242
          %v1265 = vunpack.c.l.b16 %v1243
          %v1266 = vunpack.c.h.b16 %v1243
          %v1267 = vunpack.c.l.b16 %v1244
          %v1268 = vunpack.c.h.b16 %v1244
          %v1269 = vpack.c.b16 %v1253, %v1253
          %v1270 = vpack.c.b16 %v1254, %v1254
          %v1271 = vpack.c.b16 %v1255, %v1255
          %v1272 = vpack.c.b16 %v1256, %v1256
          %v1273 = vpack.c.b16 %v1257, %v1257
          %v1274 = vpack.c.b16 %v1258, %v1258
          %v1275 = vpack.c.b16 %v1259, %v1259
          %v1276 = vpack.c.b16 %v1260, %v1260
          %v1277 = vpack.c.b16 %v1261, %v1261
          %v1278 = vpack.c.b16 %v1262, %v1262
          %v1279 = vpack.c.b16 %v1263, %v1263
          %v1280 = vpack.c.b16 %v1264, %v1264
          %v1281 = vpack.c.b16 %v1265, %v1265
          %v1282 = vpack.c.b16 %v1266, %v1266
          %v1283 = vpack.c.b16 %v1267, %v1267
          %v1284 = vpack.c.b16 %v1268, %v1268
          %1301 = vst [vmem:[#allocation17] sm:$0xf] %v1269
          %1302 = vst [vmem:[#allocation17 + $0x4] sm:$0xf] %v1270
          %1303 = vst [vmem:[#allocation17 + $0x8] sm:$0xf] %v1271
          %1304 = vst [vmem:[#allocation17 + $0xc] sm:$0xf] %v1272
          %1305 = vst [vmem:[#allocation17 + $0x10] sm:$0xf] %v1273
          %1306 = vst [vmem:[#allocation17 + $0x14] sm:$0xf] %v1274
          %1307 = vst [vmem:[#allocation17 + $0x18] sm:$0xf] %v1275
          %1308 = vst [vmem:[#allocation17 + $0x1c] sm:$0xf] %v1276
          %1309 = vst [vmem:[#allocation17 + $0x20] sm:$0xf] %v1277
          %1310 = vst [vmem:[#allocation17 + $0x24] sm:$0xf] %v1278
          %1311 = vst [vmem:[#allocation17 + $0x28] sm:$0xf] %v1279
          %1312 = vst [vmem:[#allocation17 + $0x2c] sm:$0xf] %v1280
          %1313 = vst [vmem:[#allocation17 + $0x30] sm:$0xf] %v1281
          %1314 = vst [vmem:[#allocation17 + $0x34] sm:$0xf] %v1282
          %1315 = vst [vmem:[#allocation17 + $0x38] sm:$0xf] %v1283
          %1316 = vst [vmem:[#allocation17 + $0x3c] sm:$0xf] %v1284
        $region88: #{tpu_custom_call.1} parent=43 // pred_fallthru
          _
        // Predicated region
        $region89: #{tpu_custom_call.1} parent=43 // pred_check
          %p1317 = pneg %p218
        $region90: #{tpu_custom_call.1} parent=43 // pred_check_branch
          %1319 = sbr.rel (%p1317) target = $region92
        $region91: #{tpu_custom_call.1} parent=43 // pred_region
          %s1320 = smul.u32 16, %s36
          %s1322 = ssub.s32 1024, 1024
          %1323 = vsyncadd [#allocation8], %s1322
          %s1324 = smul.addr %s1320, 64
          %s1325 = scalar_lea.hbm %s7, %s1324
          %s1326 = sshll.u32 [#allocation17], 4
          %s1327 = int_to_ptr.vmem [resolvable:$true] %s1326
          %1332 = dma.vmem_to_hbm [thread:$0]  %s1327, 1024, %s1325, [#allocation8], 64, 64, 4
        $region92: #{tpu_custom_call.1} parent=43 // pred_fallthru
          _
        // Predicated region
        $region93: #{tpu_custom_call.1} parent=43 // pred_check
          %p1333 = pneg %p218
        $region94: #{tpu_custom_call.1} parent=43 // pred_check_branch
          %1335 = sbr.rel (%p1333) target = $region96
        $region95: #{tpu_custom_call.1} parent=43 // pred_region
          %1336 = dma.done [#allocation8], 1024
        $region96: #{tpu_custom_call.1} parent=43 // pred_fallthru
          _
      $region44: #{tpu_custom_call.1} parent=5 // pred_fallthru
        _
      %p1337 = scmp.le.s32.totalorder 2, %s26
      // Predicated region
      $region97: #{tpu_custom_call.1} parent=5 // pred_check
        %p1338 = pneg %p1337
      $region98: #{tpu_custom_call.1} parent=5 // pred_check_branch
        %1340 = sbr.rel (%p1338) target = $region100
      $region99: #{tpu_custom_call.1} parent=5 // pred_region
        %s1341 = ssub.s32 %s26, 2
      $region100: #{tpu_custom_call.1} parent=5 // pred_fallthru
        _
    $region6: #{tpu_custom_call.1} parent=1 // loop_footer
      %s30 = sadd.s32 1, %s26
    $region7: #{tpu_custom_call.1} parent=1 // loop_footer_branch
      %25 = sbr.rel target = $region3
    $region8: #{tpu_custom_call.1} parent=1 // loop_exit
      _
    %1342 = vsyncpa [#allocation7], 1
    %s1343 = scalar_lea.sflag [#allocation7], 1
    %1344 = vsyncpa %s1343, 1
    %1345 = vsyncpa [#allocation10], 1
    %1346 = vsyncpa [#allocation13], 1
    %s1347 = scalar_lea.sflag [#allocation13], 1
    %1348 = vsyncpa %s1347, 1
    %1349 = vsyncpa [#allocation16], 1
    %1350 = vsyncpa [#allocation8], 1
    %s1351 = scalar_lea.sflag [#allocation8], 1
    %1352 = vsyncpa %s1351, 1

</llo_original>
